<compile_context>
chip_gen: v7x
topology: tpu7x:2x2x1
jax: 0.10.0
libtpu: 0.0.40
codegen_flags: <defaults>
</compile_context>

<pallas_src>
import jax
import jax.numpy as jnp
import numpy as np
from jax.experimental import pallas as pl
from jax.experimental.pallas import tpu as pltpu

BN_EPS = 1e-5      # nn.BatchNorm1d default eps
GINE_EPS = 0.0     # GINEConv default eps (train_eps=False)
OUT_PAD = 128      # lane-dense width for the final regressor output


def _round_up(v, m):
    return ((v + m - 1) // m) * m


# ----------------------------------------------------------------------------
# Fused Pallas kernel: 4 x (GINEConv + BatchNorm + ReLU) -> mean-pool -> MLP
# ----------------------------------------------------------------------------
def fused_gnn_kernel(src_ref, dst_ref, batch_ref,
                     x_ref, ea_ref,
                     we_ref, be_ref, wn_ref, bnn_ref, gamma_ref, beta_ref,
                     w1_ref, b1_ref, w2_ref, b2_ref, w3_ref, b3_ref,
                     out_ref):
    N = x_ref.shape[0]          # real (unpadded) node count
    E = ea_ref.shape[0]         # padded edge count
    Gp = out_ref.shape[0]       # padded graph count
    num_layers = we_ref.shape[0]
    inv_n = 1.0 / float(N)

    # ---- build 0/1 gather / scatter / pool masks in-kernel (VPU compares) ----
    # Padded edges carry index == N, so they never match the node iota and
    # contribute nothing to gather or scatter.
    src = src_ref[...]                                   # [E, 1] int32
    dst = dst_ref[...]                                   # [1, E] int32
    seg = batch_ref[...]                                 # [1, N] int32

    iota_en = jax.lax.broadcasted_iota(jnp.int32, (E, N), 1)
    G = jnp.where(src == iota_en, 1.0, 0.0).astype(jnp.bfloat16)   # [E, N] one_hot(src)
    iota_ne = jax.lax.broadcasted_iota(jnp.int32, (N, E), 0)
    S = jnp.where(iota_ne == dst, 1.0, 0.0).astype(jnp.bfloat16)   # [N, E] one_hot(dst)^T
    iota_gn = jax.lax.broadcasted_iota(jnp.int32, (Gp, N), 0)
    P_f32 = jnp.where(iota_gn == seg, 1.0, 0.0)                    # [Gp, N]
    counts = jnp.sum(P_f32, axis=1, keepdims=True)                 # [Gp, 1]
    inv_counts = 1.0 / jnp.maximum(counts, 1.0)
    P = P_f32.astype(jnp.bfloat16)

    h = x_ref[...]                               # [N, H] f32 (zero-padded to H)
    ea_bf = ea_ref[...].astype(jnp.bfloat16)     # [E, De] bf16

    # static unroll over layers; stacked weights stay resident in VMEM
    for l in range(num_layers):
        # GINEConv.lin on edge_attr (bf16 x bf16 -> f32 acc on MXU)
        edge_emb = (jnp.dot(ea_bf, we_ref[l],
                            preferred_element_type=jnp.float32) + be_ref[l])     # [E, H]
        # gather source node features
        x_j = jnp.dot(G, h.astype(jnp.bfloat16),
                      preferred_element_type=jnp.float32)                        # [E, H]
        # GINE message: relu(x_j + edge_emb)
        msg = jnp.maximum(x_j + edge_emb, 0.0)
        # sum-aggregate messages at destination nodes
        aggr = jnp.dot(S, msg.astype(jnp.bfloat16),
                       preferred_element_type=jnp.float32)                       # [N, H]
        # GINE update nn((1 + eps) * x + aggr), eps == 0
        h2 = (jnp.dot((h + aggr).astype(jnp.bfloat16), wn_ref[l],
                      preferred_element_type=jnp.float32) + bnn_ref[l])          # [N, H]
        # BatchNorm1d (training stats, biased var), single-pass statistics + ReLU
        mean = jnp.sum(h2, axis=0, keepdims=True) * inv_n
        msq = jnp.sum(h2 * h2, axis=0, keepdims=True) * inv_n
        var = msq - mean * mean
        h = jnp.maximum((h2 - mean) * jax.lax.rsqrt(var + BN_EPS) * gamma_ref[l]
                        + beta_ref[l], 0.0)

    # global_mean_pool (bf16 MXU sum, exact f32 1/count scale)
    pooled = jnp.dot(P, h.astype(jnp.bfloat16),
                     preferred_element_type=jnp.float32) * inv_counts            # [Gp, H]

    # regressor MLP (bf16 x bf16 -> f32 acc; elementwise f32)
    z = jnp.maximum(jnp.dot(pooled.astype(jnp.bfloat16), w1_ref[...],
                            preferred_element_type=jnp.float32) + b1_ref[...], 0.0)
    z = jnp.maximum(jnp.dot(z.astype(jnp.bfloat16), w2_ref[...],
                            preferred_element_type=jnp.float32) + b2_ref[...], 0.0)
    # last layer padded to 128 lanes -> unmasked, lane-dense store
    out_ref[...] = (jnp.dot(z.astype(jnp.bfloat16), w3_ref[...],
                            preferred_element_type=jnp.float32) + b3_ref[...])


# ----------------------------------------------------------------------------
# Wrapper
# ----------------------------------------------------------------------------
def cross_encoder_gnn_forward(x, edge_index, edge_attr, batch, params, num_graphs):
    N, node_dim = x.shape
    E, edge_dim = edge_attr.shape
    layers = params["layers"]
    L = len(layers)
    H = layers[0]["wn"].shape[1]
    assert node_dim <= H, "node_dim must be <= hidden_dim for layer-0 padding"

    # pad edge / graph counts to sublane-friendly sizes (exact: padded edges get
    # out-of-range index N -> all-zero mask rows/cols; padded graph rows discarded)
    E_pad = max(_round_up(E, 16), 16)
    G_pad = max(_round_up(num_graphs, 8), 8)

    src = jnp.full((E_pad,), N, jnp.int32).at[:E].set(edge_index[0].astype(jnp.int32))
    dst = jnp.full((E_pad,), N, jnp.int32).at[:E].set(edge_index[1].astype(jnp.int32))
    ea_pad = jnp.zeros((E_pad, edge_dim), jnp.float32).at[:E].set(edge_attr)

    src_col = src[:, None]                          # [E_pad, 1]
    dst_row = dst[None, :]                          # [1, E_pad]
    batch_row = batch.astype(jnp.int32)[None, :]    # [1, N]

    def pad_cols(a, w): return jnp.pad(a, ((0, 0), (0, w - a.shape[1])))
    def pad_rows(a, w): return jnp.pad(a, ((0, w - a.shape[0]), (0, 0)))
    to_bf = lambda a: a.astype(jnp.bfloat16)

    # pad node features and layer-0 weights to the uniform width H (exact)
    x_pad = pad_cols(x, H)                                                  # [N, H]
    we_all = jnp.stack([to_bf(pad_cols(lp["we"], H)) for lp in layers])     # [L, De, H] bf16
    be_all = jnp.stack([pad_cols(lp["be"], H) for lp in layers])            # [L, 1, H] f32
    wn_all = jnp.stack([to_bf(pad_rows(lp["wn"], H)) for lp in layers])     # [L, H, H] bf16
    bnn_all = jnp.stack([lp["bnn"] for lp in layers])                       # [L, 1, H]
    gamma_all = jnp.stack([lp["gamma"] for lp in layers])                   # [L, 1, H]
    beta_all = jnp.stack([lp["beta"] for lp in layers])                     # [L, 1, H]

    r = params["reg"]
    H2 = r["w2"].shape[1]
    w1 = to_bf(r["w1"])                                                     # [H, H] bf16
    w2 = to_bf(r["w2"])                                                     # [H, H/2] bf16
    w3 = to_bf(pad_cols(r["w3"], OUT_PAD))                                  # [H/2, 128] bf16
    b3 = pad_cols(r["b3"], OUT_PAD)                                         # [1, 128] f32

    args = (src_col, dst_row, batch_row, x_pad, ea_pad,
            we_all, be_all, wn_all, bnn_all, gamma_all, beta_all,
            w1, r["b1"], w2, r["b2"], w3, b3)

    # advisory cost hint for the XLA scheduler
    flops = 2 * (L * (E_pad * edge_dim * H + E_pad * N * H + N * E_pad * H + N * H * H)
                 + G_pad * N * H + G_pad * (H * H + H * H2 + H2 * OUT_PAD))
    bytes_acc = sum(int(np.prod(a.shape)) * a.dtype.itemsize for a in args) \
        + G_pad * OUT_PAD * 4
    transc = L * H + G_pad   # rsqrt per BN channel + pooling reciprocals

    vmem_spec = pl.BlockSpec(memory_space=pltpu.MemorySpace.VMEM)

    out = pl.pallas_call(
        fused_gnn_kernel,
        out_shape=jax.ShapeDtypeStruct((G_pad, OUT_PAD), jnp.float32),
        in_specs=[vmem_spec] * len(args),
        out_specs=vmem_spec,
        compiler_params=pltpu.CompilerParams(vmem_limit_bytes=32 * 1024 * 1024),
        cost_estimate=pl.CostEstimate(flops=int(flops), transcendentals=int(transc),
                                      bytes_accessed=int(bytes_acc)),
    )(*args)
    return out[:num_graphs, 0]  # .squeeze(-1)


# ----------------------------------------------------------------------------
# Pure-JAX reference (mirrors the PyTorch forward semantics, full f32)
# ----------------------------------------------------------------------------
def reference_forward(x, edge_index, edge_attr, batch, params, num_graphs):
    src, dst = edge_index[0], edge_index[1]
    h = x
    for lp in params["layers"]:
        edge_emb = edge_attr @ lp["we"] + lp["be"]
        msg = jnp.maximum(h[src] + edge_emb, 0.0)
        aggr = jax.ops.segment_sum(msg, dst, num_segments=h.shape[0])
        h2 = ((1.0 + GINE_EPS) * h + aggr) @ lp["wn"] + lp["bnn"]
        mean = h2.mean(axis=0, keepdims=True)
        var = ((h2 - mean) ** 2).mean(axis=0, keepdims=True)
        h = jnp.maximum((h2 - mean) / jnp.sqrt(var + BN_EPS) * lp["gamma"] + lp["beta"], 0.0)
    counts = jax.ops.segment_sum(jnp.ones((h.shape[0],), jnp.float32), batch,
                                 num_segments=num_graphs)
    pooled = jax.ops.segment_sum(h, batch, num_segments=num_graphs) / counts[:, None]
    r = params["reg"]
    z = jnp.maximum(pooled @ r["w1"] + r["b1"], 0.0)
    z = jnp.maximum(z @ r["w2"] + r["b2"], 0.0)
    return (z @ r["w3"] + r["b3"])[:, 0]


# ----------------------------------------------------------------------------
# Main
# ----------------------------------------------------------------------------
if __name__ == "__main__":
    node_dim, edge_dim, hidden_dim, num_layers = 8, 6, 32, 4
    N, E, num_graphs = 16, 24, 2

    keys = iter(jax.random.split(jax.random.PRNGKey(0), 64))

    # inputs
    x = jax.random.normal(next(keys), (N, node_dim), jnp.float32)
    edge_attr = jax.random.normal(next(keys), (E, edge_dim), jnp.float32)
    batch = jnp.concatenate([jnp.zeros((8,), jnp.int32), jnp.ones((8,), jnp.int32)])
    src0 = jax.random.randint(next(keys), (E // 2,), 0, 8)
    dst0 = jax.random.randint(next(keys), (E // 2,), 0, 8)
    src1 = jax.random.randint(next(keys), (E // 2,), 8, 16)
    dst1 = jax.random.randint(next(keys), (E // 2,), 8, 16)
    edge_index = jnp.stack([jnp.concatenate([src0, src1]),
                            jnp.concatenate([dst0, dst1])]).astype(jnp.int32)

    # deterministic parameter init (weights stored as [in, out] = PyTorch weight.T)
    def lin_w(k, fan_in, fan_out):
        return jax.random.normal(k, (fan_in, fan_out), jnp.float32) / jnp.sqrt(float(fan_in))

    layers = []
    in_dim = node_dim
    for _ in range(num_layers):
        layers.append(dict(
            we=lin_w(next(keys), edge_dim, in_dim),                       # GINEConv.lin
            be=jax.random.normal(next(keys), (1, in_dim), jnp.float32) * 0.01,
            wn=lin_w(next(keys), in_dim, hidden_dim),                     # GINEConv.nn (Linear)
            bnn=jax.random.normal(next(keys), (1, hidden_dim), jnp.float32) * 0.01,
            gamma=jnp.ones((1, hidden_dim), jnp.float32),                 # BatchNorm weight
            beta=jnp.zeros((1, hidden_dim), jnp.float32),                 # BatchNorm bias
        ))
        in_dim = hidden_dim

    reg = dict(
        w1=lin_w(next(keys), hidden_dim, hidden_dim),
        b1=jax.random.normal(next(keys), (1, hidden_dim), jnp.float32) * 0.01,
        w2=lin_w(next(keys), hidden_dim, hidden_dim // 2),
        b2=jax.random.normal(next(keys), (1, hidden_dim // 2), jnp.float32) * 0.01,
        w3=lin_w(next(keys), hidden_dim // 2, 1),
        b3=jnp.zeros((1, 1), jnp.float32),
    )
    params = dict(layers=layers, reg=reg)

    out = cross_encoder_gnn_forward(x, edge_index, edge_attr, batch, params, num_graphs)
    out = jax.block_until_ready(out)

    ref = jax.block_until_ready(
        reference_forward(x, edge_index, edge_attr, batch, params, num_graphs))
    # Tolerance reflects the deliberate end-to-end bf16-in / f32-accumulate matmul
    # path inside the kernel (per perf guidance); the reference is full f32.
    np.testing.assert_allclose(np.asarray(out), np.asarray(ref), rtol=1e-1, atol=1e-1)

    assert out.shape == (num_graphs,)
    print("KERNEL_OK")
</pallas_src>

<mosaic_0001>
module attributes {stable_mosaic.version = 11 : i64} {
  func.func @fused_gnn_kernel(%arg0: memref<32x1xi32, #tpu.memory_space<vmem>>, %arg1: memref<1x32xi32, #tpu.memory_space<vmem>>, %arg2: memref<1x16xi32, #tpu.memory_space<vmem>>, %arg3: memref<16x32xf32, #tpu.memory_space<vmem>>, %arg4: memref<32x6xf32, #tpu.memory_space<vmem>>, %arg5: memref<4x6x32xbf16, #tpu.memory_space<vmem>>, %arg6: memref<4x1x32xf32, #tpu.memory_space<vmem>>, %arg7: memref<4x32x32xbf16, #tpu.memory_space<vmem>>, %arg8: memref<4x1x32xf32, #tpu.memory_space<vmem>>, %arg9: memref<4x1x32xf32, #tpu.memory_space<vmem>>, %arg10: memref<4x1x32xf32, #tpu.memory_space<vmem>>, %arg11: memref<32x32xbf16, #tpu.memory_space<vmem>>, %arg12: memref<1x32xf32, #tpu.memory_space<vmem>>, %arg13: memref<32x16xbf16, #tpu.memory_space<vmem>>, %arg14: memref<1x16xf32, #tpu.memory_space<vmem>>, %arg15: memref<16x128xbf16, #tpu.memory_space<vmem>>, %arg16: memref<1x128xf32, #tpu.memory_space<vmem>>, %arg17: memref<8x128xf32, #tpu.memory_space<vmem>>) attributes {dimension_semantics = [], scalar_prefetch = 0 : i64, scratch_operands = 0 : i64, tpu.core_type = #tpu.core_type<tc>} {
    %c0 = arith.constant 0 : index
    %c0_0 = arith.constant 0 : index
    %0 = vector.load %arg0[%c0, %c0_0] : memref<32x1xi32, #tpu.memory_space<vmem>>, vector<32x1xi32>
    %c0_1 = arith.constant 0 : index
    %c0_2 = arith.constant 0 : index
    %1 = vector.load %arg1[%c0_1, %c0_2] : memref<1x32xi32, #tpu.memory_space<vmem>>, vector<1x32xi32>
    %c0_3 = arith.constant 0 : index
    %c0_4 = arith.constant 0 : index
    %2 = vector.load %arg2[%c0_3, %c0_4] : memref<1x16xi32, #tpu.memory_space<vmem>>, vector<1x16xi32>
    %3 = tpu.iota {dimensions = array<i32: 1>} : vector<32x16xi32>
    %4 = vector.broadcast %0 : vector<32x1xi32> to vector<32x16xi32>
    %5 = arith.cmpi eq, %4, %3 : vector<32x16xi32>
    %cst = arith.constant 1.000000e+00 : f32
    %cst_5 = arith.constant 0.000000e+00 : f32
    %6 = vector.broadcast %cst : f32 to vector<32x16xf32>
    %7 = vector.broadcast %cst_5 : f32 to vector<32x16xf32>
    %8 = arith.select %5, %6, %7 : vector<32x16xi1>, vector<32x16xf32>
    %9 = arith.truncf %8 : vector<32x16xf32> to vector<32x16xbf16>
    %10 = tpu.iota {dimensions = array<i32: 0>} : vector<16x32xi32>
    %11 = vector.broadcast %1 : vector<1x32xi32> to vector<16x32xi32>
    %12 = arith.cmpi eq, %10, %11 : vector<16x32xi32>
    %cst_6 = arith.constant 1.000000e+00 : f32
    %cst_7 = arith.constant 0.000000e+00 : f32
    %13 = vector.broadcast %cst_6 : f32 to vector<16x32xf32>
    %14 = vector.broadcast %cst_7 : f32 to vector<16x32xf32>
    %15 = arith.select %12, %13, %14 : vector<16x32xi1>, vector<16x32xf32>
    %16 = arith.truncf %15 : vector<16x32xf32> to vector<16x32xbf16>
    %17 = tpu.iota {dimensions = array<i32: 0>} : vector<8x16xi32>
    %18 = vector.broadcast %2 : vector<1x16xi32> to vector<8x16xi32>
    %19 = arith.cmpi eq, %17, %18 : vector<8x16xi32>
    %cst_8 = arith.constant 1.000000e+00 : f32
    %cst_9 = arith.constant 0.000000e+00 : f32
    %20 = vector.broadcast %cst_8 : f32 to vector<8x16xf32>
    %21 = vector.broadcast %cst_9 : f32 to vector<8x16xf32>
    %22 = arith.select %19, %20, %21 : vector<8x16xi1>, vector<8x16xf32>
    %cst_10 = arith.constant dense<0.000000e+00> : vector<8xf32>
    %23 = vector.multi_reduction <add>, %22, %cst_10 [1] : vector<8x16xf32> to vector<8xf32>
    %24 = vector.shape_cast %23 : vector<8xf32> to vector<8x1xf32>
    %cst_11 = arith.constant 1.000000e+00 : f32
    %25 = vector.broadcast %cst_11 : f32 to vector<8x1xf32>
    %26 = arith.maximumf %24, %25 : vector<8x1xf32>
    %cst_12 = arith.constant 1.000000e+00 : f32
    %27 = vector.broadcast %cst_12 : f32 to vector<8x1xf32>
    %28 = arith.divf %27, %26 : vector<8x1xf32>
    %29 = arith.truncf %22 : vector<8x16xf32> to vector<8x16xbf16>
    %c0_13 = arith.constant 0 : index
    %c0_14 = arith.constant 0 : index
    %30 = vector.load %arg3[%c0_13, %c0_14] : memref<16x32xf32, #tpu.memory_space<vmem>>, vector<16x32xf32>
    %c0_15 = arith.constant 0 : index
    %c0_16 = arith.constant 0 : index
    %31 = vector.load %arg4[%c0_15, %c0_16] : memref<32x6xf32, #tpu.memory_space<vmem>>, vector<32x6xf32>
    %32 = arith.truncf %31 : vector<32x6xf32> to vector<32x6xbf16>
    %c0_17 = arith.constant 0 : index
    %c0_18 = arith.constant 0 : index
    %c0_19 = arith.constant 0 : index
    %33 = vector.load %arg5[%c0_17, %c0_18, %c0_19] : memref<4x6x32xbf16, #tpu.memory_space<vmem>>, vector<1x6x32xbf16>
    %34 = vector.shape_cast %33 : vector<1x6x32xbf16> to vector<6x32xbf16>
    %cst_20 = arith.constant dense<0.000000e+00> : vector<32x32xf32>
    %35 = tpu.matmul %32, %34, %cst_20 {dimension_numbers = #tpu.dot_dimension_numbers<[1], [0], [0], [1], [0, 0, 1, 1], [], []>} : vector<32x6xbf16>, vector<6x32xbf16>, vector<32x32xf32> -> vector<32x32xf32>
    %c0_21 = arith.constant 0 : index
    %c0_22 = arith.constant 0 : index
    %c0_23 = arith.constant 0 : index
    %36 = vector.load %arg6[%c0_21, %c0_22, %c0_23] : memref<4x1x32xf32, #tpu.memory_space<vmem>>, vector<1x1x32xf32>
    %37 = vector.shape_cast %36 : vector<1x1x32xf32> to vector<1x32xf32>
    %38 = vector.broadcast %37 : vector<1x32xf32> to vector<32x32xf32>
    %39 = arith.addf %35, %38 : vector<32x32xf32>
    %40 = arith.truncf %30 : vector<16x32xf32> to vector<16x32xbf16>
    %cst_24 = arith.constant dense<0.000000e+00> : vector<32x32xf32>
    %41 = tpu.matmul %9, %40, %cst_24 {dimension_numbers = #tpu.dot_dimension_numbers<[1], [0], [0], [1], [0, 0, 1, 1], [], []>} : vector<32x16xbf16>, vector<16x32xbf16>, vector<32x32xf32> -> vector<32x32xf32>
    %42 = arith.addf %41, %39 : vector<32x32xf32>
    %cst_25 = arith.constant 0.000000e+00 : f32
    %43 = vector.broadcast %cst_25 : f32 to vector<32x32xf32>
    %44 = arith.maximumf %42, %43 : vector<32x32xf32>
    %45 = arith.truncf %44 : vector<32x32xf32> to vector<32x32xbf16>
    %cst_26 = arith.constant dense<0.000000e+00> : vector<16x32xf32>
    %46 = tpu.matmul %16, %45, %cst_26 {dimension_numbers = #tpu.dot_dimension_numbers<[1], [0], [0], [1], [0, 0, 1, 1], [], []>} : vector<16x32xbf16>, vector<32x32xbf16>, vector<16x32xf32> -> vector<16x32xf32>
    %47 = arith.addf %30, %46 : vector<16x32xf32>
    %48 = arith.truncf %47 : vector<16x32xf32> to vector<16x32xbf16>
    %c0_27 = arith.constant 0 : index
    %c0_28 = arith.constant 0 : index
    %c0_29 = arith.constant 0 : index
    %49 = vector.load %arg7[%c0_27, %c0_28, %c0_29] : memref<4x32x32xbf16, #tpu.memory_space<vmem>>, vector<1x32x32xbf16>
    %50 = vector.shape_cast %49 : vector<1x32x32xbf16> to vector<32x32xbf16>
    %cst_30 = arith.constant dense<0.000000e+00> : vector<16x32xf32>
    %51 = tpu.matmul %48, %50, %cst_30 {dimension_numbers = #tpu.dot_dimension_numbers<[1], [0], [0], [1], [0, 0, 1, 1], [], []>} : vector<16x32xbf16>, vector<32x32xbf16>, vector<16x32xf32> -> vector<16x32xf32>
    %c0_31 = arith.constant 0 : index
    %c0_32 = arith.constant 0 : index
    %c0_33 = arith.constant 0 : index
    %52 = vector.load %arg8[%c0_31, %c0_32, %c0_33] : memref<4x1x32xf32, #tpu.memory_space<vmem>>, vector<1x1x32xf32>
    %53 = vector.shape_cast %52 : vector<1x1x32xf32> to vector<1x32xf32>
    %54 = vector.broadcast %53 : vector<1x32xf32> to vector<16x32xf32>
    %55 = arith.addf %51, %54 : vector<16x32xf32>
    %cst_34 = arith.constant dense<0.000000e+00> : vector<32xf32>
    %56 = vector.multi_reduction <add>, %55, %cst_34 [0] : vector<16x32xf32> to vector<32xf32>
    %57 = vector.shape_cast %56 : vector<32xf32> to vector<1x32xf32>
    %cst_35 = arith.constant 6.250000e-02 : f32
    %58 = vector.broadcast %cst_35 : f32 to vector<1x32xf32>
    %59 = arith.mulf %57, %58 : vector<1x32xf32>
    %60 = arith.mulf %55, %55 : vector<16x32xf32>
    %cst_36 = arith.constant dense<0.000000e+00> : vector<32xf32>
    %61 = vector.multi_reduction <add>, %60, %cst_36 [0] : vector<16x32xf32> to vector<32xf32>
    %62 = vector.shape_cast %61 : vector<32xf32> to vector<1x32xf32>
    %cst_37 = arith.constant 6.250000e-02 : f32
    %63 = vector.broadcast %cst_37 : f32 to vector<1x32xf32>
    %64 = arith.mulf %62, %63 : vector<1x32xf32>
    %65 = arith.mulf %59, %59 : vector<1x32xf32>
    %66 = arith.subf %64, %65 : vector<1x32xf32>
    %67 = vector.broadcast %59 : vector<1x32xf32> to vector<16x32xf32>
    %68 = arith.subf %55, %67 : vector<16x32xf32>
    %cst_38 = arith.constant 9.99999974E-6 : f32
    %69 = vector.broadcast %cst_38 : f32 to vector<1x32xf32>
    %70 = arith.addf %66, %69 : vector<1x32xf32>
    %71 = math.rsqrt %70 : vector<1x32xf32>
    %72 = vector.broadcast %71 : vector<1x32xf32> to vector<16x32xf32>
    %73 = arith.mulf %68, %72 : vector<16x32xf32>
    %c0_39 = arith.constant 0 : index
    %c0_40 = arith.constant 0 : index
    %c0_41 = arith.constant 0 : index
    %74 = vector.load %arg9[%c0_39, %c0_40, %c0_41] : memref<4x1x32xf32, #tpu.memory_space<vmem>>, vector<1x1x32xf32>
    %75 = vector.shape_cast %74 : vector<1x1x32xf32> to vector<1x32xf32>
    %76 = vector.broadcast %75 : vector<1x32xf32> to vector<16x32xf32>
    %77 = arith.mulf %73, %76 : vector<16x32xf32>
    %c0_42 = arith.constant 0 : index
    %c0_43 = arith.constant 0 : index
    %c0_44 = arith.constant 0 : index
    %78 = vector.load %arg10[%c0_42, %c0_43, %c0_44] : memref<4x1x32xf32, #tpu.memory_space<vmem>>, vector<1x1x32xf32>
    %79 = vector.shape_cast %78 : vector<1x1x32xf32> to vector<1x32xf32>
    %80 = vector.broadcast %79 : vector<1x32xf32> to vector<16x32xf32>
    %81 = arith.addf %77, %80 : vector<16x32xf32>
    %cst_45 = arith.constant 0.000000e+00 : f32
    %82 = vector.broadcast %cst_45 : f32 to vector<16x32xf32>
    %83 = arith.maximumf %81, %82 : vector<16x32xf32>
    %c1 = arith.constant 1 : index
    %c0_46 = arith.constant 0 : index
    %c0_47 = arith.constant 0 : index
    %84 = vector.load %arg5[%c1, %c0_46, %c0_47] : memref<4x6x32xbf16, #tpu.memory_space<vmem>>, vector<1x6x32xbf16>
    %85 = vector.shape_cast %84 : vector<1x6x32xbf16> to vector<6x32xbf16>
    %cst_48 = arith.constant dense<0.000000e+00> : vector<32x32xf32>
    %86 = tpu.matmul %32, %85, %cst_48 {dimension_numbers = #tpu.dot_dimension_numbers<[1], [0], [0], [1], [0, 0, 1, 1], [], []>} : vector<32x6xbf16>, vector<6x32xbf16>, vector<32x32xf32> -> vector<32x32xf32>
    %c1_49 = arith.constant 1 : index
    %c0_50 = arith.constant 0 : index
    %c0_51 = arith.constant 0 : index
    %87 = vector.load %arg6[%c1_49, %c0_50, %c0_51] : memref<4x1x32xf32, #tpu.memory_space<vmem>>, vector<1x1x32xf32>
    %88 = vector.shape_cast %87 : vector<1x1x32xf32> to vector<1x32xf32>
    %89 = vector.broadcast %88 : vector<1x32xf32> to vector<32x32xf32>
    %90 = arith.addf %86, %89 : vector<32x32xf32>
    %91 = arith.truncf %83 : vector<16x32xf32> to vector<16x32xbf16>
    %cst_52 = arith.constant dense<0.000000e+00> : vector<32x32xf32>
    %92 = tpu.matmul %9, %91, %cst_52 {dimension_numbers = #tpu.dot_dimension_numbers<[1], [0], [0], [1], [0, 0, 1, 1], [], []>} : vector<32x16xbf16>, vector<16x32xbf16>, vector<32x32xf32> -> vector<32x32xf32>
    %93 = arith.addf %92, %90 : vector<32x32xf32>
    %cst_53 = arith.constant 0.000000e+00 : f32
    %94 = vector.broadcast %cst_53 : f32 to vector<32x32xf32>
    %95 = arith.maximumf %93, %94 : vector<32x32xf32>
    %96 = arith.truncf %95 : vector<32x32xf32> to vector<32x32xbf16>
    %cst_54 = arith.constant dense<0.000000e+00> : vector<16x32xf32>
    %97 = tpu.matmul %16, %96, %cst_54 {dimension_numbers = #tpu.dot_dimension_numbers<[1], [0], [0], [1], [0, 0, 1, 1], [], []>} : vector<16x32xbf16>, vector<32x32xbf16>, vector<16x32xf32> -> vector<16x32xf32>
    %98 = arith.addf %83, %97 : vector<16x32xf32>
    %99 = arith.truncf %98 : vector<16x32xf32> to vector<16x32xbf16>
    %c1_55 = arith.constant 1 : index
    %c0_56 = arith.constant 0 : index
    %c0_57 = arith.constant 0 : index
    %100 = vector.load %arg7[%c1_55, %c0_56, %c0_57] : memref<4x32x32xbf16, #tpu.memory_space<vmem>>, vector<1x32x32xbf16>
    %101 = vector.shape_cast %100 : vector<1x32x32xbf16> to vector<32x32xbf16>
    %cst_58 = arith.constant dense<0.000000e+00> : vector<16x32xf32>
    %102 = tpu.matmul %99, %101, %cst_58 {dimension_numbers = #tpu.dot_dimension_numbers<[1], [0], [0], [1], [0, 0, 1, 1], [], []>} : vector<16x32xbf16>, vector<32x32xbf16>, vector<16x32xf32> -> vector<16x32xf32>
    %c1_59 = arith.constant 1 : index
    %c0_60 = arith.constant 0 : index
    %c0_61 = arith.constant 0 : index
    %103 = vector.load %arg8[%c1_59, %c0_60, %c0_61] : memref<4x1x32xf32, #tpu.memory_space<vmem>>, vector<1x1x32xf32>
    %104 = vector.shape_cast %103 : vector<1x1x32xf32> to vector<1x32xf32>
    %105 = vector.broadcast %104 : vector<1x32xf32> to vector<16x32xf32>
    %106 = arith.addf %102, %105 : vector<16x32xf32>
    %cst_62 = arith.constant dense<0.000000e+00> : vector<32xf32>
    %107 = vector.multi_reduction <add>, %106, %cst_62 [0] : vector<16x32xf32> to vector<32xf32>
    %108 = vector.shape_cast %107 : vector<32xf32> to vector<1x32xf32>
    %cst_63 = arith.constant 6.250000e-02 : f32
    %109 = vector.broadcast %cst_63 : f32 to vector<1x32xf32>
    %110 = arith.mulf %108, %109 : vector<1x32xf32>
    %111 = arith.mulf %106, %106 : vector<16x32xf32>
    %cst_64 = arith.constant dense<0.000000e+00> : vector<32xf32>
    %112 = vector.multi_reduction <add>, %111, %cst_64 [0] : vector<16x32xf32> to vector<32xf32>
    %113 = vector.shape_cast %112 : vector<32xf32> to vector<1x32xf32>
    %cst_65 = arith.constant 6.250000e-02 : f32
    %114 = vector.broadcast %cst_65 : f32 to vector<1x32xf32>
    %115 = arith.mulf %113, %114 : vector<1x32xf32>
    %116 = arith.mulf %110, %110 : vector<1x32xf32>
    %117 = arith.subf %115, %116 : vector<1x32xf32>
    %118 = vector.broadcast %110 : vector<1x32xf32> to vector<16x32xf32>
    %119 = arith.subf %106, %118 : vector<16x32xf32>
    %cst_66 = arith.constant 9.99999974E-6 : f32
    %120 = vector.broadcast %cst_66 : f32 to vector<1x32xf32>
    %121 = arith.addf %117, %120 : vector<1x32xf32>
    %122 = math.rsqrt %121 : vector<1x32xf32>
    %123 = vector.broadcast %122 : vector<1x32xf32> to vector<16x32xf32>
    %124 = arith.mulf %119, %123 : vector<16x32xf32>
    %c1_67 = arith.constant 1 : index
    %c0_68 = arith.constant 0 : index
    %c0_69 = arith.constant 0 : index
    %125 = vector.load %arg9[%c1_67, %c0_68, %c0_69] : memref<4x1x32xf32, #tpu.memory_space<vmem>>, vector<1x1x32xf32>
    %126 = vector.shape_cast %125 : vector<1x1x32xf32> to vector<1x32xf32>
    %127 = vector.broadcast %126 : vector<1x32xf32> to vector<16x32xf32>
    %128 = arith.mulf %124, %127 : vector<16x32xf32>
    %c1_70 = arith.constant 1 : index
    %c0_71 = arith.constant 0 : index
    %c0_72 = arith.constant 0 : index
    %129 = vector.load %arg10[%c1_70, %c0_71, %c0_72] : memref<4x1x32xf32, #tpu.memory_space<vmem>>, vector<1x1x32xf32>
    %130 = vector.shape_cast %129 : vector<1x1x32xf32> to vector<1x32xf32>
    %131 = vector.broadcast %130 : vector<1x32xf32> to vector<16x32xf32>
    %132 = arith.addf %128, %131 : vector<16x32xf32>
    %cst_73 = arith.constant 0.000000e+00 : f32
    %133 = vector.broadcast %cst_73 : f32 to vector<16x32xf32>
    %134 = arith.maximumf %132, %133 : vector<16x32xf32>
    %c2 = arith.constant 2 : index
    %c0_74 = arith.constant 0 : index
    %c0_75 = arith.constant 0 : index
    %135 = vector.load %arg5[%c2, %c0_74, %c0_75] : memref<4x6x32xbf16, #tpu.memory_space<vmem>>, vector<1x6x32xbf16>
    %136 = vector.shape_cast %135 : vector<1x6x32xbf16> to vector<6x32xbf16>
    %cst_76 = arith.constant dense<0.000000e+00> : vector<32x32xf32>
    %137 = tpu.matmul %32, %136, %cst_76 {dimension_numbers = #tpu.dot_dimension_numbers<[1], [0], [0], [1], [0, 0, 1, 1], [], []>} : vector<32x6xbf16>, vector<6x32xbf16>, vector<32x32xf32> -> vector<32x32xf32>
    %c2_77 = arith.constant 2 : index
    %c0_78 = arith.constant 0 : index
    %c0_79 = arith.constant 0 : index
    %138 = vector.load %arg6[%c2_77, %c0_78, %c0_79] : memref<4x1x32xf32, #tpu.memory_space<vmem>>, vector<1x1x32xf32>
    %139 = vector.shape_cast %138 : vector<1x1x32xf32> to vector<1x32xf32>
    %140 = vector.broadcast %139 : vector<1x32xf32> to vector<32x32xf32>
    %141 = arith.addf %137, %140 : vector<32x32xf32>
    %142 = arith.truncf %134 : vector<16x32xf32> to vector<16x32xbf16>
    %cst_80 = arith.constant dense<0.000000e+00> : vector<32x32xf32>
    %143 = tpu.matmul %9, %142, %cst_80 {dimension_numbers = #tpu.dot_dimension_numbers<[1], [0], [0], [1], [0, 0, 1, 1], [], []>} : vector<32x16xbf16>, vector<16x32xbf16>, vector<32x32xf32> -> vector<32x32xf32>
    %144 = arith.addf %143, %141 : vector<32x32xf32>
    %cst_81 = arith.constant 0.000000e+00 : f32
    %145 = vector.broadcast %cst_81 : f32 to vector<32x32xf32>
    %146 = arith.maximumf %144, %145 : vector<32x32xf32>
    %147 = arith.truncf %146 : vector<32x32xf32> to vector<32x32xbf16>
    %cst_82 = arith.constant dense<0.000000e+00> : vector<16x32xf32>
    %148 = tpu.matmul %16, %147, %cst_82 {dimension_numbers = #tpu.dot_dimension_numbers<[1], [0], [0], [1], [0, 0, 1, 1], [], []>} : vector<16x32xbf16>, vector<32x32xbf16>, vector<16x32xf32> -> vector<16x32xf32>
    %149 = arith.addf %134, %148 : vector<16x32xf32>
    %150 = arith.truncf %149 : vector<16x32xf32> to vector<16x32xbf16>
    %c2_83 = arith.constant 2 : index
    %c0_84 = arith.constant 0 : index
    %c0_85 = arith.constant 0 : index
    %151 = vector.load %arg7[%c2_83, %c0_84, %c0_85] : memref<4x32x32xbf16, #tpu.memory_space<vmem>>, vector<1x32x32xbf16>
    %152 = vector.shape_cast %151 : vector<1x32x32xbf16> to vector<32x32xbf16>
    %cst_86 = arith.constant dense<0.000000e+00> : vector<16x32xf32>
    %153 = tpu.matmul %150, %152, %cst_86 {dimension_numbers = #tpu.dot_dimension_numbers<[1], [0], [0], [1], [0, 0, 1, 1], [], []>} : vector<16x32xbf16>, vector<32x32xbf16>, vector<16x32xf32> -> vector<16x32xf32>
    %c2_87 = arith.constant 2 : index
    %c0_88 = arith.constant 0 : index
    %c0_89 = arith.constant 0 : index
    %154 = vector.load %arg8[%c2_87, %c0_88, %c0_89] : memref<4x1x32xf32, #tpu.memory_space<vmem>>, vector<1x1x32xf32>
    %155 = vector.shape_cast %154 : vector<1x1x32xf32> to vector<1x32xf32>
    %156 = vector.broadcast %155 : vector<1x32xf32> to vector<16x32xf32>
    %157 = arith.addf %153, %156 : vector<16x32xf32>
    %cst_90 = arith.constant dense<0.000000e+00> : vector<32xf32>
    %158 = vector.multi_reduction <add>, %157, %cst_90 [0] : vector<16x32xf32> to vector<32xf32>
    %159 = vector.shape_cast %158 : vector<32xf32> to vector<1x32xf32>
    %cst_91 = arith.constant 6.250000e-02 : f32
    %160 = vector.broadcast %cst_91 : f32 to vector<1x32xf32>
    %161 = arith.mulf %159, %160 : vector<1x32xf32>
    %162 = arith.mulf %157, %157 : vector<16x32xf32>
    %cst_92 = arith.constant dense<0.000000e+00> : vector<32xf32>
    %163 = vector.multi_reduction <add>, %162, %cst_92 [0] : vector<16x32xf32> to vector<32xf32>
    %164 = vector.shape_cast %163 : vector<32xf32> to vector<1x32xf32>
    %cst_93 = arith.constant 6.250000e-02 : f32
    %165 = vector.broadcast %cst_93 : f32 to vector<1x32xf32>
    %166 = arith.mulf %164, %165 : vector<1x32xf32>
    %167 = arith.mulf %161, %161 : vector<1x32xf32>
    %168 = arith.subf %166, %167 : vector<1x32xf32>
    %169 = vector.broadcast %161 : vector<1x32xf32> to vector<16x32xf32>
    %170 = arith.subf %157, %169 : vector<16x32xf32>
    %cst_94 = arith.constant 9.99999974E-6 : f32
    %171 = vector.broadcast %cst_94 : f32 to vector<1x32xf32>
    %172 = arith.addf %168, %171 : vector<1x32xf32>
    %173 = math.rsqrt %172 : vector<1x32xf32>
    %174 = vector.broadcast %173 : vector<1x32xf32> to vector<16x32xf32>
    %175 = arith.mulf %170, %174 : vector<16x32xf32>
    %c2_95 = arith.constant 2 : index
    %c0_96 = arith.constant 0 : index
    %c0_97 = arith.constant 0 : index
    %176 = vector.load %arg9[%c2_95, %c0_96, %c0_97] : memref<4x1x32xf32, #tpu.memory_space<vmem>>, vector<1x1x32xf32>
    %177 = vector.shape_cast %176 : vector<1x1x32xf32> to vector<1x32xf32>
    %178 = vector.broadcast %177 : vector<1x32xf32> to vector<16x32xf32>
    %179 = arith.mulf %175, %178 : vector<16x32xf32>
    %c2_98 = arith.constant 2 : index
    %c0_99 = arith.constant 0 : index
    %c0_100 = arith.constant 0 : index
    %180 = vector.load %arg10[%c2_98, %c0_99, %c0_100] : memref<4x1x32xf32, #tpu.memory_space<vmem>>, vector<1x1x32xf32>
    %181 = vector.shape_cast %180 : vector<1x1x32xf32> to vector<1x32xf32>
    %182 = vector.broadcast %181 : vector<1x32xf32> to vector<16x32xf32>
    %183 = arith.addf %179, %182 : vector<16x32xf32>
    %cst_101 = arith.constant 0.000000e+00 : f32
    %184 = vector.broadcast %cst_101 : f32 to vector<16x32xf32>
    %185 = arith.maximumf %183, %184 : vector<16x32xf32>
    %c3 = arith.constant 3 : index
    %c0_102 = arith.constant 0 : index
    %c0_103 = arith.constant 0 : index
    %186 = vector.load %arg5[%c3, %c0_102, %c0_103] : memref<4x6x32xbf16, #tpu.memory_space<vmem>>, vector<1x6x32xbf16>
    %187 = vector.shape_cast %186 : vector<1x6x32xbf16> to vector<6x32xbf16>
    %cst_104 = arith.constant dense<0.000000e+00> : vector<32x32xf32>
    %188 = tpu.matmul %32, %187, %cst_104 {dimension_numbers = #tpu.dot_dimension_numbers<[1], [0], [0], [1], [0, 0, 1, 1], [], []>} : vector<32x6xbf16>, vector<6x32xbf16>, vector<32x32xf32> -> vector<32x32xf32>
    %c3_105 = arith.constant 3 : index
    %c0_106 = arith.constant 0 : index
    %c0_107 = arith.constant 0 : index
    %189 = vector.load %arg6[%c3_105, %c0_106, %c0_107] : memref<4x1x32xf32, #tpu.memory_space<vmem>>, vector<1x1x32xf32>
    %190 = vector.shape_cast %189 : vector<1x1x32xf32> to vector<1x32xf32>
    %191 = vector.broadcast %190 : vector<1x32xf32> to vector<32x32xf32>
    %192 = arith.addf %188, %191 : vector<32x32xf32>
    %193 = arith.truncf %185 : vector<16x32xf32> to vector<16x32xbf16>
    %cst_108 = arith.constant dense<0.000000e+00> : vector<32x32xf32>
    %194 = tpu.matmul %9, %193, %cst_108 {dimension_numbers = #tpu.dot_dimension_numbers<[1], [0], [0], [1], [0, 0, 1, 1], [], []>} : vector<32x16xbf16>, vector<16x32xbf16>, vector<32x32xf32> -> vector<32x32xf32>
    %195 = arith.addf %194, %192 : vector<32x32xf32>
    %cst_109 = arith.constant 0.000000e+00 : f32
    %196 = vector.broadcast %cst_109 : f32 to vector<32x32xf32>
    %197 = arith.maximumf %195, %196 : vector<32x32xf32>
    %198 = arith.truncf %197 : vector<32x32xf32> to vector<32x32xbf16>
    %cst_110 = arith.constant dense<0.000000e+00> : vector<16x32xf32>
    %199 = tpu.matmul %16, %198, %cst_110 {dimension_numbers = #tpu.dot_dimension_numbers<[1], [0], [0], [1], [0, 0, 1, 1], [], []>} : vector<16x32xbf16>, vector<32x32xbf16>, vector<16x32xf32> -> vector<16x32xf32>
    %200 = arith.addf %185, %199 : vector<16x32xf32>
    %201 = arith.truncf %200 : vector<16x32xf32> to vector<16x32xbf16>
    %c3_111 = arith.constant 3 : index
    %c0_112 = arith.constant 0 : index
    %c0_113 = arith.constant 0 : index
    %202 = vector.load %arg7[%c3_111, %c0_112, %c0_113] : memref<4x32x32xbf16, #tpu.memory_space<vmem>>, vector<1x32x32xbf16>
    %203 = vector.shape_cast %202 : vector<1x32x32xbf16> to vector<32x32xbf16>
    %cst_114 = arith.constant dense<0.000000e+00> : vector<16x32xf32>
    %204 = tpu.matmul %201, %203, %cst_114 {dimension_numbers = #tpu.dot_dimension_numbers<[1], [0], [0], [1], [0, 0, 1, 1], [], []>} : vector<16x32xbf16>, vector<32x32xbf16>, vector<16x32xf32> -> vector<16x32xf32>
    %c3_115 = arith.constant 3 : index
    %c0_116 = arith.constant 0 : index
    %c0_117 = arith.constant 0 : index
    %205 = vector.load %arg8[%c3_115, %c0_116, %c0_117] : memref<4x1x32xf32, #tpu.memory_space<vmem>>, vector<1x1x32xf32>
    %206 = vector.shape_cast %205 : vector<1x1x32xf32> to vector<1x32xf32>
    %207 = vector.broadcast %206 : vector<1x32xf32> to vector<16x32xf32>
    %208 = arith.addf %204, %207 : vector<16x32xf32>
    %cst_118 = arith.constant dense<0.000000e+00> : vector<32xf32>
    %209 = vector.multi_reduction <add>, %208, %cst_118 [0] : vector<16x32xf32> to vector<32xf32>
    %210 = vector.shape_cast %209 : vector<32xf32> to vector<1x32xf32>
    %cst_119 = arith.constant 6.250000e-02 : f32
    %211 = vector.broadcast %cst_119 : f32 to vector<1x32xf32>
    %212 = arith.mulf %210, %211 : vector<1x32xf32>
    %213 = arith.mulf %208, %208 : vector<16x32xf32>
    %cst_120 = arith.constant dense<0.000000e+00> : vector<32xf32>
    %214 = vector.multi_reduction <add>, %213, %cst_120 [0] : vector<16x32xf32> to vector<32xf32>
    %215 = vector.shape_cast %214 : vector<32xf32> to vector<1x32xf32>
    %cst_121 = arith.constant 6.250000e-02 : f32
    %216 = vector.broadcast %cst_121 : f32 to vector<1x32xf32>
    %217 = arith.mulf %215, %216 : vector<1x32xf32>
    %218 = arith.mulf %212, %212 : vector<1x32xf32>
    %219 = arith.subf %217, %218 : vector<1x32xf32>
    %220 = vector.broadcast %212 : vector<1x32xf32> to vector<16x32xf32>
    %221 = arith.subf %208, %220 : vector<16x32xf32>
    %cst_122 = arith.constant 9.99999974E-6 : f32
    %222 = vector.broadcast %cst_122 : f32 to vector<1x32xf32>
    %223 = arith.addf %219, %222 : vector<1x32xf32>
    %224 = math.rsqrt %223 : vector<1x32xf32>
    %225 = vector.broadcast %224 : vector<1x32xf32> to vector<16x32xf32>
    %226 = arith.mulf %221, %225 : vector<16x32xf32>
    %c3_123 = arith.constant 3 : index
    %c0_124 = arith.constant 0 : index
    %c0_125 = arith.constant 0 : index
    %227 = vector.load %arg9[%c3_123, %c0_124, %c0_125] : memref<4x1x32xf32, #tpu.memory_space<vmem>>, vector<1x1x32xf32>
    %228 = vector.shape_cast %227 : vector<1x1x32xf32> to vector<1x32xf32>
    %229 = vector.broadcast %228 : vector<1x32xf32> to vector<16x32xf32>
    %230 = arith.mulf %226, %229 : vector<16x32xf32>
    %c3_126 = arith.constant 3 : index
    %c0_127 = arith.constant 0 : index
    %c0_128 = arith.constant 0 : index
    %231 = vector.load %arg10[%c3_126, %c0_127, %c0_128] : memref<4x1x32xf32, #tpu.memory_space<vmem>>, vector<1x1x32xf32>
    %232 = vector.shape_cast %231 : vector<1x1x32xf32> to vector<1x32xf32>
    %233 = vector.broadcast %232 : vector<1x32xf32> to vector<16x32xf32>
    %234 = arith.addf %230, %233 : vector<16x32xf32>
    %cst_129 = arith.constant 0.000000e+00 : f32
    %235 = vector.broadcast %cst_129 : f32 to vector<16x32xf32>
    %236 = arith.maximumf %234, %235 : vector<16x32xf32>
    %237 = arith.truncf %236 : vector<16x32xf32> to vector<16x32xbf16>
    %cst_130 = arith.constant dense<0.000000e+00> : vector<8x32xf32>
    %238 = tpu.matmul %29, %237, %cst_130 {dimension_numbers = #tpu.dot_dimension_numbers<[1], [0], [0], [1], [0, 0, 1, 1], [], []>} : vector<8x16xbf16>, vector<16x32xbf16>, vector<8x32xf32> -> vector<8x32xf32>
    %239 = vector.broadcast %28 : vector<8x1xf32> to vector<8x32xf32>
    %240 = arith.mulf %238, %239 : vector<8x32xf32>
    %241 = arith.truncf %240 : vector<8x32xf32> to vector<8x32xbf16>
    %c0_131 = arith.constant 0 : index
    %c0_132 = arith.constant 0 : index
    %242 = vector.load %arg11[%c0_131, %c0_132] : memref<32x32xbf16, #tpu.memory_space<vmem>>, vector<32x32xbf16>
    %cst_133 = arith.constant dense<0.000000e+00> : vector<8x32xf32>
    %243 = tpu.matmul %241, %242, %cst_133 {dimension_numbers = #tpu.dot_dimension_numbers<[1], [0], [0], [1], [0, 0, 1, 1], [], []>} : vector<8x32xbf16>, vector<32x32xbf16>, vector<8x32xf32> -> vector<8x32xf32>
    %c0_134 = arith.constant 0 : index
    %c0_135 = arith.constant 0 : index
    %244 = vector.load %arg12[%c0_134, %c0_135] : memref<1x32xf32, #tpu.memory_space<vmem>>, vector<1x32xf32>
    %245 = vector.broadcast %244 : vector<1x32xf32> to vector<8x32xf32>
    %246 = arith.addf %243, %245 : vector<8x32xf32>
    %cst_136 = arith.constant 0.000000e+00 : f32
    %247 = vector.broadcast %cst_136 : f32 to vector<8x32xf32>
    %248 = arith.maximumf %246, %247 : vector<8x32xf32>
    %249 = arith.truncf %248 : vector<8x32xf32> to vector<8x32xbf16>
    %c0_137 = arith.constant 0 : index
    %c0_138 = arith.constant 0 : index
    %250 = vector.load %arg13[%c0_137, %c0_138] : memref<32x16xbf16, #tpu.memory_space<vmem>>, vector<32x16xbf16>
    %cst_139 = arith.constant dense<0.000000e+00> : vector<8x16xf32>
    %251 = tpu.matmul %249, %250, %cst_139 {dimension_numbers = #tpu.dot_dimension_numbers<[1], [0], [0], [1], [0, 0, 1, 1], [], []>} : vector<8x32xbf16>, vector<32x16xbf16>, vector<8x16xf32> -> vector<8x16xf32>
    %c0_140 = arith.constant 0 : index
    %c0_141 = arith.constant 0 : index
    %252 = vector.load %arg14[%c0_140, %c0_141] : memref<1x16xf32, #tpu.memory_space<vmem>>, vector<1x16xf32>
    %253 = vector.broadcast %252 : vector<1x16xf32> to vector<8x16xf32>
    %254 = arith.addf %251, %253 : vector<8x16xf32>
    %cst_142 = arith.constant 0.000000e+00 : f32
    %255 = vector.broadcast %cst_142 : f32 to vector<8x16xf32>
    %256 = arith.maximumf %254, %255 : vector<8x16xf32>
    %257 = arith.truncf %256 : vector<8x16xf32> to vector<8x16xbf16>
    %c0_143 = arith.constant 0 : index
    %c0_144 = arith.constant 0 : index
    %258 = vector.load %arg15[%c0_143, %c0_144] : memref<16x128xbf16, #tpu.memory_space<vmem>>, vector<16x128xbf16>
    %cst_145 = arith.constant dense<0.000000e+00> : vector<8x128xf32>
    %259 = tpu.matmul %257, %258, %cst_145 {dimension_numbers = #tpu.dot_dimension_numbers<[1], [0], [0], [1], [0, 0, 1, 1], [], []>} : vector<8x16xbf16>, vector<16x128xbf16>, vector<8x128xf32> -> vector<8x128xf32>
    %c0_146 = arith.constant 0 : index
    %c0_147 = arith.constant 0 : index
    %260 = vector.load %arg16[%c0_146, %c0_147] : memref<1x128xf32, #tpu.memory_space<vmem>>, vector<1x128xf32>
    %261 = vector.broadcast %260 : vector<1x128xf32> to vector<8x128xf32>
    %262 = arith.addf %259, %261 : vector<8x128xf32>
    %c0_148 = arith.constant 0 : index
    %c0_149 = arith.constant 0 : index
    %263 = vector.load %arg17[%c0_148, %c0_149] : memref<8x128xf32, #tpu.memory_space<vmem>>, vector<8x128xf32>
    tpu.vector_store %arg17[%c0_148, %c0_149], %262 {strides = array<i32>} : memref<8x128xf32, #tpu.memory_space<vmem>>, vector<8x128xf32>,
    return
  }
}

</mosaic_0001>

<llo_original>
// kernel: tpu_custom_call.1
$region0: #{tpu_custom_call.1}
  #allocation0 [shape = 'u32[]', space=smem, size = 0x4, offset = 0x4, fixed_abs, tag = 'smem constant byte address 0x4 - core index']
  #allocation1 [shape = 'u32[144,128]{1,0:T(1,128)}', space=vmem, size = 0x12000, scoped, tag = 'internal scratch']
  %s0 = inlined_call_operand.vmem [shape: s32[32,1], index: 0, kind: input, shape index: {}]
  %s1 = inlined_call_operand.vmem [shape: s32[1,32], index: 1, kind: input, shape index: {}]
  %s2 = inlined_call_operand.vmem [shape: s32[1,16], index: 2, kind: input, shape index: {}]
  %s3 = inlined_call_operand.vmem [shape: f32[16,32], index: 3, kind: input, shape index: {}]
  %s4 = inlined_call_operand.vmem [shape: f32[32,6], index: 4, kind: input, shape index: {}]
  %s5 = inlined_call_operand.vmem [shape: bf16[4,6,32], index: 5, kind: input, shape index: {}]
  %s6 = inlined_call_operand.vmem [shape: f32[4,1,32], index: 6, kind: input, shape index: {}]
  %s7 = inlined_call_operand.vmem [shape: bf16[4,32,32], index: 7, kind: input, shape index: {}]
  %s8 = inlined_call_operand.vmem [shape: f32[4,1,32], index: 8, kind: input, shape index: {}]
  %s9 = inlined_call_operand.vmem [shape: f32[4,1,32], index: 9, kind: input, shape index: {}]
  %s10 = inlined_call_operand.vmem [shape: f32[4,1,32], index: 10, kind: input, shape index: {}]
  %s11 = inlined_call_operand.vmem [shape: bf16[32,32], index: 11, kind: input, shape index: {}]
  %s12 = inlined_call_operand.vmem [shape: f32[1,32], index: 12, kind: input, shape index: {}]
  %s13 = inlined_call_operand.vmem [shape: bf16[32,16], index: 13, kind: input, shape index: {}]
  %s14 = inlined_call_operand.vmem [shape: f32[1,16], index: 14, kind: input, shape index: {}]
  %s15 = inlined_call_operand.vmem [shape: bf16[16,128], index: 15, kind: input, shape index: {}]
  %s16 = inlined_call_operand.vmem [shape: f32[1,128], index: 16, kind: input, shape index: {}]
  %s17 = inlined_call_operand.hbm [shape: f32[8,128], index: 17, kind: output, shape index: {}]
  %s18 = sld [smem:[#allocation0]]
  $region78: #{tpu_custom_call.1} parent=0
    _
  %s20 = ssub.s32 1, %s18
  %s21 = scalar_select 0, %s20, %s18
  $region1: #{tpu_custom_call.1} parent=0
    #allocation2 [shape = 'u8[4096]{0}', space=vmem, size = 0x1000, scoped, tag = 'output window, operand 0, single buffered']
    #allocation3 [shape = 's32[1]{0}', space=sflag, size = 0x4, scoped, tag = 'scoped memory for tpu_custom_call.1']
    %22 = vsyncpa [#allocation3], 0
    // Predicated region
    $region2: #{tpu_custom_call.1} parent=1 // pred_check
      _
    $region3: #{tpu_custom_call.1} parent=1 // pred_check_branch
      %24 = sbr.rel (0) target = $region5
    $region4: #{tpu_custom_call.1} parent=1 // pred_region
      _
    $region5: #{tpu_custom_call.1} parent=1 // pred_fallthru
      _
    // Predicated region
    $region6: #{tpu_custom_call.1} parent=1 // pred_check
      _
    $region7: #{tpu_custom_call.1} parent=1 // pred_check_branch
      %26 = sbr.rel (0) target = $region9
    $region8: #{tpu_custom_call.1} parent=1 // pred_region
      _
    $region9: #{tpu_custom_call.1} parent=1 // pred_fallthru
      _
    // Predicated region
    $region10: #{tpu_custom_call.1} parent=1 // pred_check
      _
    $region11: #{tpu_custom_call.1} parent=1 // pred_check_branch
      %28 = sbr.rel (0) target = $region13
    $region12: #{tpu_custom_call.1} parent=1 // pred_region
      _
    $region13: #{tpu_custom_call.1} parent=1 // pred_fallthru
      _
    // Predicated region
    $region14: #{tpu_custom_call.1} parent=1 // pred_check
      _
    $region15: #{tpu_custom_call.1} parent=1 // pred_check_branch
      %30 = sbr.rel (0) target = $region17
    $region16: #{tpu_custom_call.1} parent=1 // pred_region
      _
    $region17: #{tpu_custom_call.1} parent=1 // pred_fallthru
      _
    // Predicated region
    $region18: #{tpu_custom_call.1} parent=1 // pred_check
      _
    $region19: #{tpu_custom_call.1} parent=1 // pred_check_branch
      %32 = sbr.rel (0) target = $region21
    $region20: #{tpu_custom_call.1} parent=1 // pred_region
      _
    $region21: #{tpu_custom_call.1} parent=1 // pred_fallthru
      _
    // Predicated region
    $region22: #{tpu_custom_call.1} parent=1 // pred_check
      _
    $region23: #{tpu_custom_call.1} parent=1 // pred_check_branch
      %34 = sbr.rel (0) target = $region25
    $region24: #{tpu_custom_call.1} parent=1 // pred_region
      _
    $region25: #{tpu_custom_call.1} parent=1 // pred_fallthru
      _
    // Predicated region
    $region26: #{tpu_custom_call.1} parent=1 // pred_check
      _
    $region27: #{tpu_custom_call.1} parent=1 // pred_check_branch
      %36 = sbr.rel (0) target = $region29
    $region28: #{tpu_custom_call.1} parent=1 // pred_region
      _
    $region29: #{tpu_custom_call.1} parent=1 // pred_fallthru
      _
    // Predicated region
    $region30: #{tpu_custom_call.1} parent=1 // pred_check
      _
    $region31: #{tpu_custom_call.1} parent=1 // pred_check_branch
      %38 = sbr.rel (0) target = $region33
    $region32: #{tpu_custom_call.1} parent=1 // pred_region
      _
    $region33: #{tpu_custom_call.1} parent=1 // pred_fallthru
      _
    // Predicated region
    $region34: #{tpu_custom_call.1} parent=1 // pred_check
      _
    $region35: #{tpu_custom_call.1} parent=1 // pred_check_branch
      %40 = sbr.rel (0) target = $region37
    $region36: #{tpu_custom_call.1} parent=1 // pred_region
      _
    $region37: #{tpu_custom_call.1} parent=1 // pred_fallthru
      _
    // Predicated region
    $region38: #{tpu_custom_call.1} parent=1 // pred_check
      _
    $region39: #{tpu_custom_call.1} parent=1 // pred_check_branch
      %42 = sbr.rel (0) target = $region41
    $region40: #{tpu_custom_call.1} parent=1 // pred_region
      _
    $region41: #{tpu_custom_call.1} parent=1 // pred_fallthru
      _
    // Predicated region
    $region42: #{tpu_custom_call.1} parent=1 // pred_check
      _
    $region43: #{tpu_custom_call.1} parent=1 // pred_check_branch
      %44 = sbr.rel (0) target = $region45
    $region44: #{tpu_custom_call.1} parent=1 // pred_region
      _
    $region45: #{tpu_custom_call.1} parent=1 // pred_fallthru
      _
    // Predicated region
    $region46: #{tpu_custom_call.1} parent=1 // pred_check
      _
    $region47: #{tpu_custom_call.1} parent=1 // pred_check_branch
      %46 = sbr.rel (0) target = $region49
    $region48: #{tpu_custom_call.1} parent=1 // pred_region
      _
    $region49: #{tpu_custom_call.1} parent=1 // pred_fallthru
      _
    // Predicated region
    $region50: #{tpu_custom_call.1} parent=1 // pred_check
      _
    $region51: #{tpu_custom_call.1} parent=1 // pred_check_branch
      %48 = sbr.rel (0) target = $region53
    $region52: #{tpu_custom_call.1} parent=1 // pred_region
      _
    $region53: #{tpu_custom_call.1} parent=1 // pred_fallthru
      _
    // Predicated region
    $region54: #{tpu_custom_call.1} parent=1 // pred_check
      _
    $region55: #{tpu_custom_call.1} parent=1 // pred_check_branch
      %50 = sbr.rel (0) target = $region57
    $region56: #{tpu_custom_call.1} parent=1 // pred_region
      _
    $region57: #{tpu_custom_call.1} parent=1 // pred_fallthru
      _
    // Predicated region
    $region58: #{tpu_custom_call.1} parent=1 // pred_check
      _
    $region59: #{tpu_custom_call.1} parent=1 // pred_check_branch
      %52 = sbr.rel (0) target = $region61
    $region60: #{tpu_custom_call.1} parent=1 // pred_region
      _
    $region61: #{tpu_custom_call.1} parent=1 // pred_fallthru
      _
    // Predicated region
    $region62: #{tpu_custom_call.1} parent=1 // pred_check
      _
    $region63: #{tpu_custom_call.1} parent=1 // pred_check_branch
      %54 = sbr.rel (0) target = $region65
    $region64: #{tpu_custom_call.1} parent=1 // pred_region
      _
    $region65: #{tpu_custom_call.1} parent=1 // pred_fallthru
      _
    // Predicated region
    $region66: #{tpu_custom_call.1} parent=1 // pred_check
      _
    $region67: #{tpu_custom_call.1} parent=1 // pred_check_branch
      %56 = sbr.rel (0) target = $region69
    $region68: #{tpu_custom_call.1} parent=1 // pred_region
      _
    $region69: #{tpu_custom_call.1} parent=1 // pred_fallthru
      _
    %v58 = vld [vmem:[%s0] sm:$0xff]
    %v59 = vld [vmem:[%s0 + $0x8] sm:$0xff]
    %v60 = vld [vmem:[%s0 + $0x10] sm:$0xff]
    %v61 = vld [vmem:[%s0 + $0x18] sm:$0xff]
    %v62 = vld [vmem:[%s1] sm:$0x1]
    %v63 = vld [vmem:[%s2] sm:$0x1]
    %v64 = vlaneseq
    %v65 = vand.u32 %v64, 127
    %66 = vset.pattern.permute.xlu0 0
    %67 = vperm.xlu0 %66, %v58
    %v68 = vpop.permute.xlu0 %67
    %69 = vset.pattern.permute.xlu0 0
    %70 = vperm.xlu0 %69, %v59
    %v71 = vpop.permute.xlu0 %70
    %72 = vset.pattern.permute.xlu0 0
    %73 = vperm.xlu0 %72, %v60
    %v74 = vpop.permute.xlu0 %73
    %75 = vset.pattern.permute.xlu0 0
    %76 = vperm.xlu0 %75, %v61
    %v77 = vpop.permute.xlu0 %76
    %vm78 = vcmp.eq.s32.totalorder %v68, %v65
    %vm79 = vcmp.eq.s32.totalorder %v71, %v65
    %vm80 = vcmp.eq.s32.totalorder %v74, %v65
    %vm81 = vcmp.eq.s32.totalorder %v77, %v65
    %v82 = vsel %vm78, 1.0, 0.0
    %v83 = vsel %vm79, 1.0, 0.0
    %v84 = vsel %vm80, 1.0, 0.0
    %v85 = vsel %vm81, 1.0, 0.0
    %v86 = vpack.c.bf16 %v83, %v82
    %v87 = vpack.c.bf16 %v85, %v84
    %v88 = vlaneseq
    %v89 = vshrl.u32 %v88, 7
    %v90 = vadd.s32 %v89, 8
    %v91 = vlaneseq
    %v92 = vshrl.u32 %v91, 7
    %v93 = vsub.s32 0, %v92
    %v94 = vrot.slane %v62, %v93
    %vm95 = vcmp.eq.s32.totalorder %v89, %v94
    %vm96 = vcmp.eq.s32.totalorder %v90, %v94
    %v97 = vsel %vm95, 1.0, 0.0
    %v98 = vsel %vm96, 1.0, 0.0
    %v99 = vpack.c.bf16 %v98, %v97
    %v100 = vlaneseq
    %v101 = vshrl.u32 %v100, 7
    %v102 = vsub.s32 0, %v101
    %v103 = vrot.slane %v63, %v102
    %vm104 = vcmp.eq.s32.totalorder %v89, %v103
    %v105 = vsel %vm104, 1.0, 0.0
    %vm106 = vcmask 130048
    %v107 = vsel %vm106, %v105, 0.0
    %108 = vadd.xlane.f32.xlu0 %v107
    %v109 = vpop.xlane.xlu0 %108
    %v110 = vmax.f32 %v109, 1.0
    %v111 = vrcp.pop %v110
    %v112 = vmul.f32 1.0, %v111
    %v113 = vpack.c.bf16 %v105, %v105
    %v114 = vld [vmem:[%s3] sm:$0xff]
    %v115 = vld [vmem:[%s3 + $0x8] sm:$0xff]
    %v116 = vld [vmem:[%s4] sm:$0xff]
    %v117 = vld [vmem:[%s4 + $0x8] sm:$0xff]
    %v118 = vld [vmem:[%s4 + $0x10] sm:$0xff]
    %v119 = vld [vmem:[%s4 + $0x18] sm:$0xff]
    %v120 = vpack.c.bf16 %v117, %v116
    %v121 = vpack.c.bf16 %v119, %v118
    %v122 = vld [vmem:[%s5] sm:$0x7]
    %v123 = vld [vmem:[%s6] sm:$0x1]
    %v125 = vlaneseq
    %v126 = vshrl.u32 %v125, 7
    %v127 = vsub.s32 0, %v126
    %v128 = vrot.slane %v123, %v127
    %vm130 = vcmask 48128
    %v132 = vsel %vm130, %v120, 0
    %v135 = vsel %vm130, %v121, 0
    %vm137 = vcmask 1042432
    %v139 = vsel %vm137, %v122, 0
    %141 = vmatprep.subr.bf16.mxu0 0
    %142 = vmatpush1.bf16.msra.mxu0 %v139
    %143 = vmatprep.subr.bf16.mxu0 0
    %144 = vmatpush1.bf16.msra.mxu0 0
    %145 = vmatprep.subr.bf16.mxu0 0
    %146 = vmatpush1.bf16.msra.mxu0 0
    %147 = vmatprep.subr.bf16.mxu0 0
    %148 = vmatpush1.bf16.msra.mxu0 0
    %149 = vmatprep.subr.bf16.mxu0 0
    %150 = vmatpush1.bf16.msra.mxu0 0
    %151 = vmatprep.subr.bf16.mxu0 0
    %152 = vmatpush1.bf16.msra.mxu0 0
    %153 = vmatprep.subr.bf16.mxu0 0
    %154 = vmatpush1.bf16.msra.mxu0 0
    %155 = vmatprep.subr.bf16.mxu0 0
    %156 = vmatpush1.bf16.msra.mxu0 0
    %157 = vmatprep.subr.bf16.mxu0 0
    %158 = vmatpush1.bf16.msra.mxu0 0
    %159 = vmatprep.subr.bf16.mxu0 0
    %160 = vmatpush1.bf16.msra.mxu0 0
    %161 = vmatprep.subr.bf16.mxu0 0
    %162 = vmatpush1.bf16.msra.mxu0 0
    %163 = vmatprep.subr.bf16.mxu0 0
    %164 = vmatpush1.bf16.msra.mxu0 0
    %165 = vmatprep.subr.bf16.mxu0 0
    %166 = vmatpush1.bf16.msra.mxu0 0
    %167 = vmatprep.subr.bf16.mxu0 0
    %168 = vmatpush1.bf16.msra.mxu0 0
    %169 = vmatprep.subr.bf16.mxu0 0
    %170 = vmatpush1.bf16.msra.mxu0 0
    %171 = vmatprep.subr.bf16.mxu0 0
    %172 = vmatpush1.bf16.msra.mxu0 0
    %173 = vmatprep.mubr.bf16.mxu0 0
    %174 = vmatmul.mubr.bf16.gmra.mrb[0].mxu0 %v132
    %v175 = vpop.f32.mrb[0].mxu0
    %v176 = vadd.f32 %v128, %v175
    %v177 = vpop.f32.mrb[0].mxu0
    %v178 = vpop.f32.mrb[0].mxu0
    %v179 = vadd.f32 %v128, %v178
    %v180 = vpop.f32.mrb[0].mxu0
    %181 = vmatprep.mubr.bf16.mxu0 0
    %182 = vmatmul.mubr.bf16.gmra.mrb[0].mxu0 %v135
    %v183 = vpop.f32.mrb[0].mxu0
    %v184 = vadd.f32 %v128, %v183
    %v185 = vpop.f32.mrb[0].mxu0
    %v186 = vpop.f32.mrb[0].mxu0
    %v187 = vadd.f32 %v128, %v186
    %v188 = vpop.f32.mrb[0].mxu0
    %189 = vdwg.mxu0
    %v190 = vpack.c.bf16 %v115, %v114
    %v192 = vsel %vm106, %v86, 0
    %v195 = vsel %vm106, %v87, 0
    %197 = vmatprep.subr.bf16.mxu0 0
    %198 = vmatpush1.bf16.msra.mxu0 %v190
    %199 = vmatprep.subr.bf16.mxu0 0
    %200 = vmatpush1.bf16.msra.mxu0 0
    %201 = vmatprep.subr.bf16.mxu0 0
    %202 = vmatpush1.bf16.msra.mxu0 0
    %203 = vmatprep.subr.bf16.mxu0 0
    %204 = vmatpush1.bf16.msra.mxu0 0
    %205 = vmatprep.subr.bf16.mxu0 0
    %206 = vmatpush1.bf16.msra.mxu0 0
    %207 = vmatprep.subr.bf16.mxu0 0
    %208 = vmatpush1.bf16.msra.mxu0 0
    %209 = vmatprep.subr.bf16.mxu0 0
    %210 = vmatpush1.bf16.msra.mxu0 0
    %211 = vmatprep.subr.bf16.mxu0 0
    %212 = vmatpush1.bf16.msra.mxu0 0
    %213 = vmatprep.subr.bf16.mxu0 0
    %214 = vmatpush1.bf16.msra.mxu0 0
    %215 = vmatprep.subr.bf16.mxu0 0
    %216 = vmatpush1.bf16.msra.mxu0 0
    %217 = vmatprep.subr.bf16.mxu0 0
    %218 = vmatpush1.bf16.msra.mxu0 0
    %219 = vmatprep.subr.bf16.mxu0 0
    %220 = vmatpush1.bf16.msra.mxu0 0
    %221 = vmatprep.subr.bf16.mxu0 0
    %222 = vmatpush1.bf16.msra.mxu0 0
    %223 = vmatprep.subr.bf16.mxu0 0
    %224 = vmatpush1.bf16.msra.mxu0 0
    %225 = vmatprep.subr.bf16.mxu0 0
    %226 = vmatpush1.bf16.msra.mxu0 0
    %227 = vmatprep.subr.bf16.mxu0 0
    %228 = vmatpush1.bf16.msra.mxu0 0
    %229 = vmatprep.mubr.bf16.mxu0 0
    %230 = vmatmul.mubr.bf16.gmra.mrb[0].mxu0 %v192
    %v231 = vpop.f32.mrb[0].mxu0
    %v232 = vadd.f32 %v176, %v231
    %v233 = vpop.f32.mrb[0].mxu0
    %v234 = vpop.f32.mrb[0].mxu0
    %v235 = vadd.f32 %v179, %v234
    %v236 = vpop.f32.mrb[0].mxu0
    %237 = vmatprep.mubr.bf16.mxu0 0
    %238 = vmatmul.mubr.bf16.gmra.mrb[0].mxu0 %v195
    %v239 = vpop.f32.mrb[0].mxu0
    %v240 = vadd.f32 %v184, %v239
    %v241 = vpop.f32.mrb[0].mxu0
    %v242 = vpop.f32.mrb[0].mxu0
    %v243 = vadd.f32 %v187, %v242
    %v244 = vpop.f32.mrb[0].mxu0
    %245 = vdwg.mxu0
    %v246 = vmax.f32 %v232, 0.0
    %v247 = vmax.f32 %v235, 0.0
    %v248 = vmax.f32 %v240, 0.0
    %v249 = vmax.f32 %v243, 0.0
    %v250 = vpack.c.bf16 %v247, %v246
    %v251 = vpack.c.bf16 %v249, %v248
    %vm252 = vcmask 261120
    %v254 = vsel %vm252, %v99, 0
    %256 = vmatprep.subr.bf16.mxu0 0
    %257 = vmatpush1.bf16.msra.mxu0 %v250
    %258 = vmatprep.subr.bf16.mxu0 0
    %259 = vmatpush1.bf16.msra.mxu0 %v251
    %260 = vmatprep.subr.bf16.mxu0 0
    %261 = vmatpush1.bf16.msra.mxu0 0
    %262 = vmatprep.subr.bf16.mxu0 0
    %263 = vmatpush1.bf16.msra.mxu0 0
    %264 = vmatprep.subr.bf16.mxu0 0
    %265 = vmatpush1.bf16.msra.mxu0 0
    %266 = vmatprep.subr.bf16.mxu0 0
    %267 = vmatpush1.bf16.msra.mxu0 0
    %268 = vmatprep.subr.bf16.mxu0 0
    %269 = vmatpush1.bf16.msra.mxu0 0
    %270 = vmatprep.subr.bf16.mxu0 0
    %271 = vmatpush1.bf16.msra.mxu0 0
    %272 = vmatprep.subr.bf16.mxu0 0
    %273 = vmatpush1.bf16.msra.mxu0 0
    %274 = vmatprep.subr.bf16.mxu0 0
    %275 = vmatpush1.bf16.msra.mxu0 0
    %276 = vmatprep.subr.bf16.mxu0 0
    %277 = vmatpush1.bf16.msra.mxu0 0
    %278 = vmatprep.subr.bf16.mxu0 0
    %279 = vmatpush1.bf16.msra.mxu0 0
    %280 = vmatprep.subr.bf16.mxu0 0
    %281 = vmatpush1.bf16.msra.mxu0 0
    %282 = vmatprep.subr.bf16.mxu0 0
    %283 = vmatpush1.bf16.msra.mxu0 0
    %284 = vmatprep.subr.bf16.mxu0 0
    %285 = vmatpush1.bf16.msra.mxu0 0
    %286 = vmatprep.subr.bf16.mxu0 0
    %287 = vmatpush1.bf16.msra.mxu0 0
    %288 = vmatprep.mubr.bf16.mxu0 0
    %289 = vmatmul.mubr.bf16.gmra.mrb[0].mxu0 %v254
    %v290 = vpop.f32.mrb[0].mxu0
    %v291 = vadd.f32 0.0, %v290
    %v292 = vpop.f32.mrb[0].mxu0
    %v293 = vpop.f32.mrb[0].mxu0
    %v294 = vadd.f32 0.0, %v293
    %v295 = vpop.f32.mrb[0].mxu0
    %296 = vdwg.mxu0
    %v297 = vadd.f32 %v114, %v291
    %v298 = vadd.f32 %v115, %v294
    %v299 = vpack.c.bf16 %v298, %v297
    %v300 = vld [vmem:[%s7] sm:$0xf]
    %v301 = vld [vmem:[%s7 + $0x4] sm:$0xf]
    %v302 = vld [vmem:[%s7 + $0x8] sm:$0xf]
    %v303 = vld [vmem:[%s7 + $0xc] sm:$0xf]
    %v304 = vld [vmem:[%s8] sm:$0x1]
    %v306 = vlaneseq
    %v307 = vshrl.u32 %v306, 7
    %v308 = vsub.s32 0, %v307
    %v309 = vrot.slane %v304, %v308
    %v315 = vunpack.c.l.b16 %v300
    %v316 = vunpack.c.l.b16 %v301
    %v317 = vunpack.c.l.b16 %v302
    %v318 = vunpack.c.l.b16 %v303
    %v319 = vpack.c.b16 %v316, %v315
    %v320 = vpack.c.b16 %v318, %v317
    %v324 = vsel %vm252, %v299, 0
    %326 = vmatprep.subr.bf16.mxu0 0
    %327 = vmatpush1.bf16.msra.mxu0 %v319
    %328 = vmatprep.subr.bf16.mxu0 0
    %329 = vmatpush1.bf16.msra.mxu0 %v320
    %330 = vmatprep.subr.bf16.mxu0 0
    %331 = vmatpush1.bf16.msra.mxu0 0
    %332 = vmatprep.subr.bf16.mxu0 0
    %333 = vmatpush1.bf16.msra.mxu0 0
    %334 = vmatprep.subr.bf16.mxu0 0
    %335 = vmatpush1.bf16.msra.mxu0 0
    %336 = vmatprep.subr.bf16.mxu0 0
    %337 = vmatpush1.bf16.msra.mxu0 0
    %338 = vmatprep.subr.bf16.mxu0 0
    %339 = vmatpush1.bf16.msra.mxu0 0
    %340 = vmatprep.subr.bf16.mxu0 0
    %341 = vmatpush1.bf16.msra.mxu0 0
    %342 = vmatprep.subr.bf16.mxu0 0
    %343 = vmatpush1.bf16.msra.mxu0 0
    %344 = vmatprep.subr.bf16.mxu0 0
    %345 = vmatpush1.bf16.msra.mxu0 0
    %346 = vmatprep.subr.bf16.mxu0 0
    %347 = vmatpush1.bf16.msra.mxu0 0
    %348 = vmatprep.subr.bf16.mxu0 0
    %349 = vmatpush1.bf16.msra.mxu0 0
    %350 = vmatprep.subr.bf16.mxu0 0
    %351 = vmatpush1.bf16.msra.mxu0 0
    %352 = vmatprep.subr.bf16.mxu0 0
    %353 = vmatpush1.bf16.msra.mxu0 0
    %354 = vmatprep.subr.bf16.mxu0 0
    %355 = vmatpush1.bf16.msra.mxu0 0
    %356 = vmatprep.subr.bf16.mxu0 0
    %357 = vmatpush1.bf16.msra.mxu0 0
    %358 = vmatprep.mubr.bf16.mxu0 0
    %359 = vmatmul.mubr.bf16.gmra.mrb[0].mxu0 %v324
    %v360 = vpop.f32.mrb[0].mxu0
    %v361 = vadd.f32 %v309, %v360
    %v362 = vpop.f32.mrb[0].mxu0
    %v363 = vpop.f32.mrb[0].mxu0
    %v364 = vadd.f32 %v309, %v363
    %v365 = vpop.f32.mrb[0].mxu0
    %366 = vdwg.mxu0
    %v367 = vsel %vm252, %v361, 0.0
    %v368 = vsel %vm252, %v364, 0.0
    %v369 = vadd.f32 %v367, %v368
    %v370 = vrot.slane %v369, 4
    %v371 = vadd.f32 %v369, %v370
    %v372 = vrot.slane %v371, 2
    %v373 = vadd.f32 %v371, %v372
    %v374 = vrot.slane %v373, 1
    %v375 = vadd.f32 %v373, %v374
    %v376 = vmul.f32 %v375, 0.0625
    %v377 = vmul.f32 %v361, %v361
    %v378 = vmul.f32 %v364, %v364
    %v379 = vsel %vm252, %v377, 0.0
    %v380 = vsel %vm252, %v378, 0.0
    %v381 = vadd.f32 %v379, %v380
    %v382 = vrot.slane %v381, 4
    %v383 = vadd.f32 %v381, %v382
    %v384 = vrot.slane %v383, 2
    %v385 = vadd.f32 %v383, %v384
    %v386 = vrot.slane %v385, 1
    %v387 = vadd.f32 %v385, %v386
    %v388 = vmul.f32 %v387, 0.0625
    %v389 = vmul.f32 %v376, %v376
    %v390 = vsub.f32 %v388, %v389
    %v391 = vsub.f32 %v361, %v376
    %v392 = vsub.f32 %v364, %v376
    %v393 = vadd.f32 %v390, 1e-05
    %v394 = vrsqrt.pop %v393
    %v395 = vmul.f32 %v391, %v394
    %v396 = vmul.f32 %v392, %v394
    %v397 = vld [vmem:[%s9] sm:$0x1]
    %v399 = vlaneseq
    %v400 = vshrl.u32 %v399, 7
    %v401 = vsub.s32 0, %v400
    %v402 = vrot.slane %v397, %v401
    %v404 = vmul.f32 %v395, %v402
    %v405 = vmul.f32 %v396, %v402
    %v406 = vld [vmem:[%s10] sm:$0x1]
    %v408 = vlaneseq
    %v409 = vshrl.u32 %v408, 7
    %v410 = vsub.s32 0, %v409
    %v411 = vrot.slane %v406, %v410
    %v413 = vadd.f32 %v404, %v411
    %v414 = vadd.f32 %v405, %v411
    %v415 = vmax.f32 %v413, 0.0
    %v416 = vmax.f32 %v414, 0.0
    %s417 = scalar_lea.vmem %s5, 4
    %v418 = vld [vmem:[%s417] sm:$0x7]
    %s419 = scalar_lea.vmem %s6, 1
    %v420 = vld [vmem:[%s419] sm:$0x1]
    %v422 = vlaneseq
    %v423 = vshrl.u32 %v422, 7
    %v424 = vsub.s32 0, %v423
    %v425 = vrot.slane %v420, %v424
    %v428 = vsel %vm137, %v418, 0
    %430 = vmatprep.subr.bf16.mxu0 0
    %431 = vmatpush1.bf16.msra.mxu0 %v428
    %432 = vmatprep.subr.bf16.mxu0 0
    %433 = vmatpush1.bf16.msra.mxu0 0
    %434 = vmatprep.subr.bf16.mxu0 0
    %435 = vmatpush1.bf16.msra.mxu0 0
    %436 = vmatprep.subr.bf16.mxu0 0
    %437 = vmatpush1.bf16.msra.mxu0 0
    %438 = vmatprep.subr.bf16.mxu0 0
    %439 = vmatpush1.bf16.msra.mxu0 0
    %440 = vmatprep.subr.bf16.mxu0 0
    %441 = vmatpush1.bf16.msra.mxu0 0
    %442 = vmatprep.subr.bf16.mxu0 0
    %443 = vmatpush1.bf16.msra.mxu0 0
    %444 = vmatprep.subr.bf16.mxu0 0
    %445 = vmatpush1.bf16.msra.mxu0 0
    %446 = vmatprep.subr.bf16.mxu0 0
    %447 = vmatpush1.bf16.msra.mxu0 0
    %448 = vmatprep.subr.bf16.mxu0 0
    %449 = vmatpush1.bf16.msra.mxu0 0
    %450 = vmatprep.subr.bf16.mxu0 0
    %451 = vmatpush1.bf16.msra.mxu0 0
    %452 = vmatprep.subr.bf16.mxu0 0
    %453 = vmatpush1.bf16.msra.mxu0 0
    %454 = vmatprep.subr.bf16.mxu0 0
    %455 = vmatpush1.bf16.msra.mxu0 0
    %456 = vmatprep.subr.bf16.mxu0 0
    %457 = vmatpush1.bf16.msra.mxu0 0
    %458 = vmatprep.subr.bf16.mxu0 0
    %459 = vmatpush1.bf16.msra.mxu0 0
    %460 = vmatprep.subr.bf16.mxu0 0
    %461 = vmatpush1.bf16.msra.mxu0 0
    %462 = vmatprep.mubr.bf16.mxu0 0
    %463 = vmatmul.mubr.bf16.gmra.mrb[0].mxu0 %v132
    %v464 = vpop.f32.mrb[0].mxu0
    %v465 = vadd.f32 %v425, %v464
    %v466 = vpop.f32.mrb[0].mxu0
    %v467 = vpop.f32.mrb[0].mxu0
    %v468 = vadd.f32 %v425, %v467
    %v469 = vpop.f32.mrb[0].mxu0
    %470 = vmatprep.mubr.bf16.mxu0 0
    %471 = vmatmul.mubr.bf16.gmra.mrb[0].mxu0 %v135
    %v472 = vpop.f32.mrb[0].mxu0
    %v473 = vadd.f32 %v425, %v472
    %v474 = vpop.f32.mrb[0].mxu0
    %v475 = vpop.f32.mrb[0].mxu0
    %v476 = vadd.f32 %v425, %v475
    %v477 = vpop.f32.mrb[0].mxu0
    %478 = vdwg.mxu0
    %v479 = vpack.c.bf16 %v416, %v415
    %480 = vmatprep.subr.bf16.mxu0 0
    %481 = vmatpush1.bf16.msra.mxu0 %v479
    %482 = vmatprep.subr.bf16.mxu0 0
    %483 = vmatpush1.bf16.msra.mxu0 0
    %484 = vmatprep.subr.bf16.mxu0 0
    %485 = vmatpush1.bf16.msra.mxu0 0
    %486 = vmatprep.subr.bf16.mxu0 0
    %487 = vmatpush1.bf16.msra.mxu0 0
    %488 = vmatprep.subr.bf16.mxu0 0
    %489 = vmatpush1.bf16.msra.mxu0 0
    %490 = vmatprep.subr.bf16.mxu0 0
    %491 = vmatpush1.bf16.msra.mxu0 0
    %492 = vmatprep.subr.bf16.mxu0 0
    %493 = vmatpush1.bf16.msra.mxu0 0
    %494 = vmatprep.subr.bf16.mxu0 0
    %495 = vmatpush1.bf16.msra.mxu0 0
    %496 = vmatprep.subr.bf16.mxu0 0
    %497 = vmatpush1.bf16.msra.mxu0 0
    %498 = vmatprep.subr.bf16.mxu0 0
    %499 = vmatpush1.bf16.msra.mxu0 0
    %500 = vmatprep.subr.bf16.mxu0 0
    %501 = vmatpush1.bf16.msra.mxu0 0
    %502 = vmatprep.subr.bf16.mxu0 0
    %503 = vmatpush1.bf16.msra.mxu0 0
    %504 = vmatprep.subr.bf16.mxu0 0
    %505 = vmatpush1.bf16.msra.mxu0 0
    %506 = vmatprep.subr.bf16.mxu0 0
    %507 = vmatpush1.bf16.msra.mxu0 0
    %508 = vmatprep.subr.bf16.mxu0 0
    %509 = vmatpush1.bf16.msra.mxu0 0
    %510 = vmatprep.subr.bf16.mxu0 0
    %511 = vmatpush1.bf16.msra.mxu0 0
    %512 = vmatprep.mubr.bf16.mxu0 0
    %513 = vmatmul.mubr.bf16.gmra.mrb[0].mxu0 %v192
    %v514 = vpop.f32.mrb[0].mxu0
    %v515 = vadd.f32 %v465, %v514
    %v516 = vpop.f32.mrb[0].mxu0
    %v517 = vpop.f32.mrb[0].mxu0
    %v518 = vadd.f32 %v468, %v517
    %v519 = vpop.f32.mrb[0].mxu0
    %520 = vmatprep.mubr.bf16.mxu0 0
    %521 = vmatmul.mubr.bf16.gmra.mrb[0].mxu0 %v195
    %v522 = vpop.f32.mrb[0].mxu0
    %v523 = vadd.f32 %v473, %v522
    %v524 = vpop.f32.mrb[0].mxu0
    %v525 = vpop.f32.mrb[0].mxu0
    %v526 = vadd.f32 %v476, %v525
    %v527 = vpop.f32.mrb[0].mxu0
    %528 = vdwg.mxu0
    %v529 = vmax.f32 %v515, 0.0
    %v530 = vmax.f32 %v518, 0.0
    %v531 = vmax.f32 %v523, 0.0
    %v532 = vmax.f32 %v526, 0.0
    %v533 = vpack.c.bf16 %v530, %v529
    %v534 = vpack.c.bf16 %v532, %v531
    %535 = vmatprep.subr.bf16.mxu0 0
    %536 = vmatpush1.bf16.msra.mxu0 %v533
    %537 = vmatprep.subr.bf16.mxu0 0
    %538 = vmatpush1.bf16.msra.mxu0 %v534
    %539 = vmatprep.subr.bf16.mxu0 0
    %540 = vmatpush1.bf16.msra.mxu0 0
    %541 = vmatprep.subr.bf16.mxu0 0
    %542 = vmatpush1.bf16.msra.mxu0 0
    %543 = vmatprep.subr.bf16.mxu0 0
    %544 = vmatpush1.bf16.msra.mxu0 0
    %545 = vmatprep.subr.bf16.mxu0 0
    %546 = vmatpush1.bf16.msra.mxu0 0
    %547 = vmatprep.subr.bf16.mxu0 0
    %548 = vmatpush1.bf16.msra.mxu0 0
    %549 = vmatprep.subr.bf16.mxu0 0
    %550 = vmatpush1.bf16.msra.mxu0 0
    %551 = vmatprep.subr.bf16.mxu0 0
    %552 = vmatpush1.bf16.msra.mxu0 0
    %553 = vmatprep.subr.bf16.mxu0 0
    %554 = vmatpush1.bf16.msra.mxu0 0
    %555 = vmatprep.subr.bf16.mxu0 0
    %556 = vmatpush1.bf16.msra.mxu0 0
    %557 = vmatprep.subr.bf16.mxu0 0
    %558 = vmatpush1.bf16.msra.mxu0 0
    %559 = vmatprep.subr.bf16.mxu0 0
    %560 = vmatpush1.bf16.msra.mxu0 0
    %561 = vmatprep.subr.bf16.mxu0 0
    %562 = vmatpush1.bf16.msra.mxu0 0
    %563 = vmatprep.subr.bf16.mxu0 0
    %564 = vmatpush1.bf16.msra.mxu0 0
    %565 = vmatprep.subr.bf16.mxu0 0
    %566 = vmatpush1.bf16.msra.mxu0 0
    %567 = vmatprep.mubr.bf16.mxu0 0
    %568 = vmatmul.mubr.bf16.gmra.mrb[0].mxu0 %v254
    %v569 = vpop.f32.mrb[0].mxu0
    %v570 = vadd.f32 0.0, %v569
    %v571 = vpop.f32.mrb[0].mxu0
    %v572 = vpop.f32.mrb[0].mxu0
    %v573 = vadd.f32 0.0, %v572
    %v574 = vpop.f32.mrb[0].mxu0
    %575 = vdwg.mxu0
    %v576 = vadd.f32 %v415, %v570
    %v577 = vadd.f32 %v416, %v573
    %v578 = vpack.c.bf16 %v577, %v576
    %s579 = scalar_lea.vmem %s7, 16
    %v580 = vld [vmem:[%s579] sm:$0xf]
    %v581 = vld [vmem:[%s579 + $0x4] sm:$0xf]
    %v582 = vld [vmem:[%s579 + $0x8] sm:$0xf]
    %v583 = vld [vmem:[%s579 + $0xc] sm:$0xf]
    %s584 = scalar_lea.vmem %s8, 1
    %v585 = vld [vmem:[%s584] sm:$0x1]
    %v587 = vlaneseq
    %v588 = vshrl.u32 %v587, 7
    %v589 = vsub.s32 0, %v588
    %v590 = vrot.slane %v585, %v589
    %v596 = vunpack.c.l.b16 %v580
    %v597 = vunpack.c.l.b16 %v581
    %v598 = vunpack.c.l.b16 %v582
    %v599 = vunpack.c.l.b16 %v583
    %v600 = vpack.c.b16 %v597, %v596
    %v601 = vpack.c.b16 %v599, %v598
    %v605 = vsel %vm252, %v578, 0
    %607 = vmatprep.subr.bf16.mxu0 0
    %608 = vmatpush1.bf16.msra.mxu0 %v600
    %609 = vmatprep.subr.bf16.mxu0 0
    %610 = vmatpush1.bf16.msra.mxu0 %v601
    %611 = vmatprep.subr.bf16.mxu0 0
    %612 = vmatpush1.bf16.msra.mxu0 0
    %613 = vmatprep.subr.bf16.mxu0 0
    %614 = vmatpush1.bf16.msra.mxu0 0
    %615 = vmatprep.subr.bf16.mxu0 0
    %616 = vmatpush1.bf16.msra.mxu0 0
    %617 = vmatprep.subr.bf16.mxu0 0
    %618 = vmatpush1.bf16.msra.mxu0 0
    %619 = vmatprep.subr.bf16.mxu0 0
    %620 = vmatpush1.bf16.msra.mxu0 0
    %621 = vmatprep.subr.bf16.mxu0 0
    %622 = vmatpush1.bf16.msra.mxu0 0
    %623 = vmatprep.subr.bf16.mxu0 0
    %624 = vmatpush1.bf16.msra.mxu0 0
    %625 = vmatprep.subr.bf16.mxu0 0
    %626 = vmatpush1.bf16.msra.mxu0 0
    %627 = vmatprep.subr.bf16.mxu0 0
    %628 = vmatpush1.bf16.msra.mxu0 0
    %629 = vmatprep.subr.bf16.mxu0 0
    %630 = vmatpush1.bf16.msra.mxu0 0
    %631 = vmatprep.subr.bf16.mxu0 0
    %632 = vmatpush1.bf16.msra.mxu0 0
    %633 = vmatprep.subr.bf16.mxu0 0
    %634 = vmatpush1.bf16.msra.mxu0 0
    %635 = vmatprep.subr.bf16.mxu0 0
    %636 = vmatpush1.bf16.msra.mxu0 0
    %637 = vmatprep.subr.bf16.mxu0 0
    %638 = vmatpush1.bf16.msra.mxu0 0
    %639 = vmatprep.mubr.bf16.mxu0 0
    %640 = vmatmul.mubr.bf16.gmra.mrb[0].mxu0 %v605
    %v641 = vpop.f32.mrb[0].mxu0
    %v642 = vadd.f32 %v590, %v641
    %v643 = vpop.f32.mrb[0].mxu0
    %v644 = vpop.f32.mrb[0].mxu0
    %v645 = vadd.f32 %v590, %v644
    %v646 = vpop.f32.mrb[0].mxu0
    %647 = vdwg.mxu0
    %v648 = vsel %vm252, %v642, 0.0
    %v649 = vsel %vm252, %v645, 0.0
    %v650 = vadd.f32 %v648, %v649
    %v651 = vrot.slane %v650, 4
    %v652 = vadd.f32 %v650, %v651
    %v653 = vrot.slane %v652, 2
    %v654 = vadd.f32 %v652, %v653
    %v655 = vrot.slane %v654, 1
    %v656 = vadd.f32 %v654, %v655
    %v657 = vmul.f32 %v656, 0.0625
    %v658 = vmul.f32 %v642, %v642
    %v659 = vmul.f32 %v645, %v645
    %v660 = vsel %vm252, %v658, 0.0
    %v661 = vsel %vm252, %v659, 0.0
    %v662 = vadd.f32 %v660, %v661
    %v663 = vrot.slane %v662, 4
    %v664 = vadd.f32 %v662, %v663
    %v665 = vrot.slane %v664, 2
    %v666 = vadd.f32 %v664, %v665
    %v667 = vrot.slane %v666, 1
    %v668 = vadd.f32 %v666, %v667
    %v669 = vmul.f32 %v668, 0.0625
    %v670 = vmul.f32 %v657, %v657
    %v671 = vsub.f32 %v669, %v670
    %v672 = vsub.f32 %v642, %v657
    %v673 = vsub.f32 %v645, %v657
    %v674 = vadd.f32 %v671, 1e-05
    %v675 = vrsqrt.pop %v674
    %v676 = vmul.f32 %v672, %v675
    %v677 = vmul.f32 %v673, %v675
    %s678 = scalar_lea.vmem %s9, 1
    %v679 = vld [vmem:[%s678] sm:$0x1]
    %v681 = vlaneseq
    %v682 = vshrl.u32 %v681, 7
    %v683 = vsub.s32 0, %v682
    %v684 = vrot.slane %v679, %v683
    %v686 = vmul.f32 %v676, %v684
    %v687 = vmul.f32 %v677, %v684
    %s688 = scalar_lea.vmem %s10, 1
    %v689 = vld [vmem:[%s688] sm:$0x1]
    %v691 = vlaneseq
    %v692 = vshrl.u32 %v691, 7
    %v693 = vsub.s32 0, %v692
    %v694 = vrot.slane %v689, %v693
    %v696 = vadd.f32 %v686, %v694
    %v697 = vadd.f32 %v687, %v694
    %v698 = vmax.f32 %v696, 0.0
    %v699 = vmax.f32 %v697, 0.0
    %s700 = scalar_lea.vmem %s5, 8
    %v701 = vld [vmem:[%s700] sm:$0x7]
    %s702 = scalar_lea.vmem %s6, 2
    %v703 = vld [vmem:[%s702] sm:$0x1]
    %v705 = vlaneseq
    %v706 = vshrl.u32 %v705, 7
    %v707 = vsub.s32 0, %v706
    %v708 = vrot.slane %v703, %v707
    %v711 = vsel %vm137, %v701, 0
    %713 = vmatprep.subr.bf16.mxu0 0
    %714 = vmatpush1.bf16.msra.mxu0 %v711
    %715 = vmatprep.subr.bf16.mxu0 0
    %716 = vmatpush1.bf16.msra.mxu0 0
    %717 = vmatprep.subr.bf16.mxu0 0
    %718 = vmatpush1.bf16.msra.mxu0 0
    %719 = vmatprep.subr.bf16.mxu0 0
    %720 = vmatpush1.bf16.msra.mxu0 0
    %721 = vmatprep.subr.bf16.mxu0 0
    %722 = vmatpush1.bf16.msra.mxu0 0
    %723 = vmatprep.subr.bf16.mxu0 0
    %724 = vmatpush1.bf16.msra.mxu0 0
    %725 = vmatprep.subr.bf16.mxu0 0
    %726 = vmatpush1.bf16.msra.mxu0 0
    %727 = vmatprep.subr.bf16.mxu0 0
    %728 = vmatpush1.bf16.msra.mxu0 0
    %729 = vmatprep.subr.bf16.mxu0 0
    %730 = vmatpush1.bf16.msra.mxu0 0
    %731 = vmatprep.subr.bf16.mxu0 0
    %732 = vmatpush1.bf16.msra.mxu0 0
    %733 = vmatprep.subr.bf16.mxu0 0
    %734 = vmatpush1.bf16.msra.mxu0 0
    %735 = vmatprep.subr.bf16.mxu0 0
    %736 = vmatpush1.bf16.msra.mxu0 0
    %737 = vmatprep.subr.bf16.mxu0 0
    %738 = vmatpush1.bf16.msra.mxu0 0
    %739 = vmatprep.subr.bf16.mxu0 0
    %740 = vmatpush1.bf16.msra.mxu0 0
    %741 = vmatprep.subr.bf16.mxu0 0
    %742 = vmatpush1.bf16.msra.mxu0 0
    %743 = vmatprep.subr.bf16.mxu0 0
    %744 = vmatpush1.bf16.msra.mxu0 0
    %745 = vmatprep.mubr.bf16.mxu0 0
    %746 = vmatmul.mubr.bf16.gmra.mrb[0].mxu0 %v132
    %v747 = vpop.f32.mrb[0].mxu0
    %v748 = vadd.f32 %v708, %v747
    %v749 = vpop.f32.mrb[0].mxu0
    %v750 = vpop.f32.mrb[0].mxu0
    %v751 = vadd.f32 %v708, %v750
    %v752 = vpop.f32.mrb[0].mxu0
    %753 = vmatprep.mubr.bf16.mxu0 0
    %754 = vmatmul.mubr.bf16.gmra.mrb[0].mxu0 %v135
    %v755 = vpop.f32.mrb[0].mxu0
    %v756 = vadd.f32 %v708, %v755
    %v757 = vpop.f32.mrb[0].mxu0
    %v758 = vpop.f32.mrb[0].mxu0
    %v759 = vadd.f32 %v708, %v758
    %v760 = vpop.f32.mrb[0].mxu0
    %761 = vdwg.mxu0
    %v762 = vpack.c.bf16 %v699, %v698
    %763 = vmatprep.subr.bf16.mxu0 0
    %764 = vmatpush1.bf16.msra.mxu0 %v762
    %765 = vmatprep.subr.bf16.mxu0 0
    %766 = vmatpush1.bf16.msra.mxu0 0
    %767 = vmatprep.subr.bf16.mxu0 0
    %768 = vmatpush1.bf16.msra.mxu0 0
    %769 = vmatprep.subr.bf16.mxu0 0
    %770 = vmatpush1.bf16.msra.mxu0 0
    %771 = vmatprep.subr.bf16.mxu0 0
    %772 = vmatpush1.bf16.msra.mxu0 0
    %773 = vmatprep.subr.bf16.mxu0 0
    %774 = vmatpush1.bf16.msra.mxu0 0
    %775 = vmatprep.subr.bf16.mxu0 0
    %776 = vmatpush1.bf16.msra.mxu0 0
    %777 = vmatprep.subr.bf16.mxu0 0
    %778 = vmatpush1.bf16.msra.mxu0 0
    %779 = vmatprep.subr.bf16.mxu0 0
    %780 = vmatpush1.bf16.msra.mxu0 0
    %781 = vmatprep.subr.bf16.mxu0 0
    %782 = vmatpush1.bf16.msra.mxu0 0
    %783 = vmatprep.subr.bf16.mxu0 0
    %784 = vmatpush1.bf16.msra.mxu0 0
    %785 = vmatprep.subr.bf16.mxu0 0
    %786 = vmatpush1.bf16.msra.mxu0 0
    %787 = vmatprep.subr.bf16.mxu0 0
    %788 = vmatpush1.bf16.msra.mxu0 0
    %789 = vmatprep.subr.bf16.mxu0 0
    %790 = vmatpush1.bf16.msra.mxu0 0
    %791 = vmatprep.subr.bf16.mxu0 0
    %792 = vmatpush1.bf16.msra.mxu0 0
    %793 = vmatprep.subr.bf16.mxu0 0
    %794 = vmatpush1.bf16.msra.mxu0 0
    %795 = vmatprep.mubr.bf16.mxu0 0
    %796 = vmatmul.mubr.bf16.gmra.mrb[0].mxu0 %v192
    %v797 = vpop.f32.mrb[0].mxu0
    %v798 = vadd.f32 %v748, %v797
    %v799 = vpop.f32.mrb[0].mxu0
    %v800 = vpop.f32.mrb[0].mxu0
    %v801 = vadd.f32 %v751, %v800
    %v802 = vpop.f32.mrb[0].mxu0
    %803 = vmatprep.mubr.bf16.mxu0 0
    %804 = vmatmul.mubr.bf16.gmra.mrb[0].mxu0 %v195
    %v805 = vpop.f32.mrb[0].mxu0
    %v806 = vadd.f32 %v756, %v805
    %v807 = vpop.f32.mrb[0].mxu0
    %v808 = vpop.f32.mrb[0].mxu0
    %v809 = vadd.f32 %v759, %v808
    %v810 = vpop.f32.mrb[0].mxu0
    %811 = vdwg.mxu0
    %v812 = vmax.f32 %v798, 0.0
    %v813 = vmax.f32 %v801, 0.0
    %v814 = vmax.f32 %v806, 0.0
    %v815 = vmax.f32 %v809, 0.0
    %v816 = vpack.c.bf16 %v813, %v812
    %v817 = vpack.c.bf16 %v815, %v814
    %818 = vmatprep.subr.bf16.mxu0 0
    %819 = vmatpush1.bf16.msra.mxu0 %v816
    %820 = vmatprep.subr.bf16.mxu0 0
    %821 = vmatpush1.bf16.msra.mxu0 %v817
    %822 = vmatprep.subr.bf16.mxu0 0
    %823 = vmatpush1.bf16.msra.mxu0 0
    %824 = vmatprep.subr.bf16.mxu0 0
    %825 = vmatpush1.bf16.msra.mxu0 0
    %826 = vmatprep.subr.bf16.mxu0 0
    %827 = vmatpush1.bf16.msra.mxu0 0
    %828 = vmatprep.subr.bf16.mxu0 0
    %829 = vmatpush1.bf16.msra.mxu0 0
    %830 = vmatprep.subr.bf16.mxu0 0
    %831 = vmatpush1.bf16.msra.mxu0 0
    %832 = vmatprep.subr.bf16.mxu0 0
    %833 = vmatpush1.bf16.msra.mxu0 0
    %834 = vmatprep.subr.bf16.mxu0 0
    %835 = vmatpush1.bf16.msra.mxu0 0
    %836 = vmatprep.subr.bf16.mxu0 0
    %837 = vmatpush1.bf16.msra.mxu0 0
    %838 = vmatprep.subr.bf16.mxu0 0
    %839 = vmatpush1.bf16.msra.mxu0 0
    %840 = vmatprep.subr.bf16.mxu0 0
    %841 = vmatpush1.bf16.msra.mxu0 0
    %842 = vmatprep.subr.bf16.mxu0 0
    %843 = vmatpush1.bf16.msra.mxu0 0
    %844 = vmatprep.subr.bf16.mxu0 0
    %845 = vmatpush1.bf16.msra.mxu0 0
    %846 = vmatprep.subr.bf16.mxu0 0
    %847 = vmatpush1.bf16.msra.mxu0 0
    %848 = vmatprep.subr.bf16.mxu0 0
    %849 = vmatpush1.bf16.msra.mxu0 0
    %850 = vmatprep.mubr.bf16.mxu0 0
    %851 = vmatmul.mubr.bf16.gmra.mrb[0].mxu0 %v254
    %v852 = vpop.f32.mrb[0].mxu0
    %v853 = vadd.f32 0.0, %v852
    %v854 = vpop.f32.mrb[0].mxu0
    %v855 = vpop.f32.mrb[0].mxu0
    %v856 = vadd.f32 0.0, %v855
    %v857 = vpop.f32.mrb[0].mxu0
    %858 = vdwg.mxu0
    %v859 = vadd.f32 %v698, %v853
    %v860 = vadd.f32 %v699, %v856
    %v861 = vpack.c.bf16 %v860, %v859
    %s862 = scalar_lea.vmem %s7, 32
    %v863 = vld [vmem:[%s862] sm:$0xf]
    %v864 = vld [vmem:[%s862 + $0x4] sm:$0xf]
    %v865 = vld [vmem:[%s862 + $0x8] sm:$0xf]
    %v866 = vld [vmem:[%s862 + $0xc] sm:$0xf]
    %s867 = scalar_lea.vmem %s8, 2
    %v868 = vld [vmem:[%s867] sm:$0x1]
    %v870 = vlaneseq
    %v871 = vshrl.u32 %v870, 7
    %v872 = vsub.s32 0, %v871
    %v873 = vrot.slane %v868, %v872
    %v879 = vunpack.c.l.b16 %v863
    %v880 = vunpack.c.l.b16 %v864
    %v881 = vunpack.c.l.b16 %v865
    %v882 = vunpack.c.l.b16 %v866
    %v883 = vpack.c.b16 %v880, %v879
    %v884 = vpack.c.b16 %v882, %v881
    %v888 = vsel %vm252, %v861, 0
    %890 = vmatprep.subr.bf16.mxu0 0
    %891 = vmatpush1.bf16.msra.mxu0 %v883
    %892 = vmatprep.subr.bf16.mxu0 0
    %893 = vmatpush1.bf16.msra.mxu0 %v884
    %894 = vmatprep.subr.bf16.mxu0 0
    %895 = vmatpush1.bf16.msra.mxu0 0
    %896 = vmatprep.subr.bf16.mxu0 0
    %897 = vmatpush1.bf16.msra.mxu0 0
    %898 = vmatprep.subr.bf16.mxu0 0
    %899 = vmatpush1.bf16.msra.mxu0 0
    %900 = vmatprep.subr.bf16.mxu0 0
    %901 = vmatpush1.bf16.msra.mxu0 0
    %902 = vmatprep.subr.bf16.mxu0 0
    %903 = vmatpush1.bf16.msra.mxu0 0
    %904 = vmatprep.subr.bf16.mxu0 0
    %905 = vmatpush1.bf16.msra.mxu0 0
    %906 = vmatprep.subr.bf16.mxu0 0
    %907 = vmatpush1.bf16.msra.mxu0 0
    %908 = vmatprep.subr.bf16.mxu0 0
    %909 = vmatpush1.bf16.msra.mxu0 0
    %910 = vmatprep.subr.bf16.mxu0 0
    %911 = vmatpush1.bf16.msra.mxu0 0
    %912 = vmatprep.subr.bf16.mxu0 0
    %913 = vmatpush1.bf16.msra.mxu0 0
    %914 = vmatprep.subr.bf16.mxu0 0
    %915 = vmatpush1.bf16.msra.mxu0 0
    %916 = vmatprep.subr.bf16.mxu0 0
    %917 = vmatpush1.bf16.msra.mxu0 0
    %918 = vmatprep.subr.bf16.mxu0 0
    %919 = vmatpush1.bf16.msra.mxu0 0
    %920 = vmatprep.subr.bf16.mxu0 0
    %921 = vmatpush1.bf16.msra.mxu0 0
    %922 = vmatprep.mubr.bf16.mxu0 0
    %923 = vmatmul.mubr.bf16.gmra.mrb[0].mxu0 %v888
    %v924 = vpop.f32.mrb[0].mxu0
    %v925 = vadd.f32 %v873, %v924
    %v926 = vpop.f32.mrb[0].mxu0
    %v927 = vpop.f32.mrb[0].mxu0
    %v928 = vadd.f32 %v873, %v927
    %v929 = vpop.f32.mrb[0].mxu0
    %930 = vdwg.mxu0
    %v931 = vsel %vm252, %v925, 0.0
    %v932 = vsel %vm252, %v928, 0.0
    %v933 = vadd.f32 %v931, %v932
    %v934 = vrot.slane %v933, 4
    %v935 = vadd.f32 %v933, %v934
    %v936 = vrot.slane %v935, 2
    %v937 = vadd.f32 %v935, %v936
    %v938 = vrot.slane %v937, 1
    %v939 = vadd.f32 %v937, %v938
    %v940 = vmul.f32 %v939, 0.0625
    %v941 = vmul.f32 %v925, %v925
    %v942 = vmul.f32 %v928, %v928
    %v943 = vsel %vm252, %v941, 0.0
    %v944 = vsel %vm252, %v942, 0.0
    %v945 = vadd.f32 %v943, %v944
    %v946 = vrot.slane %v945, 4
    %v947 = vadd.f32 %v945, %v946
    %v948 = vrot.slane %v947, 2
    %v949 = vadd.f32 %v947, %v948
    %v950 = vrot.slane %v949, 1
    %v951 = vadd.f32 %v949, %v950
    %v952 = vmul.f32 %v951, 0.0625
    %v953 = vmul.f32 %v940, %v940
    %v954 = vsub.f32 %v952, %v953
    %v955 = vsub.f32 %v925, %v940
    %v956 = vsub.f32 %v928, %v940
    %v957 = vadd.f32 %v954, 1e-05
    %v958 = vrsqrt.pop %v957
    %v959 = vmul.f32 %v955, %v958
    %v960 = vmul.f32 %v956, %v958
    %s961 = scalar_lea.vmem %s9, 2
    %v962 = vld [vmem:[%s961] sm:$0x1]
    %v964 = vlaneseq
    %v965 = vshrl.u32 %v964, 7
    %v966 = vsub.s32 0, %v965
    %v967 = vrot.slane %v962, %v966
    %v969 = vmul.f32 %v959, %v967
    %v970 = vmul.f32 %v960, %v967
    %s971 = scalar_lea.vmem %s10, 2
    %v972 = vld [vmem:[%s971] sm:$0x1]
    %v974 = vlaneseq
    %v975 = vshrl.u32 %v974, 7
    %v976 = vsub.s32 0, %v975
    %v977 = vrot.slane %v972, %v976
    %v979 = vadd.f32 %v969, %v977
    %v980 = vadd.f32 %v970, %v977
    %v981 = vmax.f32 %v979, 0.0
    %v982 = vmax.f32 %v980, 0.0
    %s983 = scalar_lea.vmem %s5, 12
    %v984 = vld [vmem:[%s983] sm:$0x7]
    %s985 = scalar_lea.vmem %s6, 3
    %v986 = vld [vmem:[%s985] sm:$0x1]
    %v988 = vlaneseq
    %v989 = vshrl.u32 %v988, 7
    %v990 = vsub.s32 0, %v989
    %v991 = vrot.slane %v986, %v990
    %v994 = vsel %vm137, %v984, 0
    %996 = vmatprep.subr.bf16.mxu0 0
    %997 = vmatpush1.bf16.msra.mxu0 %v994
    %998 = vmatprep.subr.bf16.mxu0 0
    %999 = vmatpush1.bf16.msra.mxu0 0
    %1000 = vmatprep.subr.bf16.mxu0 0
    %1001 = vmatpush1.bf16.msra.mxu0 0
    %1002 = vmatprep.subr.bf16.mxu0 0
    %1003 = vmatpush1.bf16.msra.mxu0 0
    %1004 = vmatprep.subr.bf16.mxu0 0
    %1005 = vmatpush1.bf16.msra.mxu0 0
    %1006 = vmatprep.subr.bf16.mxu0 0
    %1007 = vmatpush1.bf16.msra.mxu0 0
    %1008 = vmatprep.subr.bf16.mxu0 0
    %1009 = vmatpush1.bf16.msra.mxu0 0
    %1010 = vmatprep.subr.bf16.mxu0 0
    %1011 = vmatpush1.bf16.msra.mxu0 0
    %1012 = vmatprep.subr.bf16.mxu0 0
    %1013 = vmatpush1.bf16.msra.mxu0 0
    %1014 = vmatprep.subr.bf16.mxu0 0
    %1015 = vmatpush1.bf16.msra.mxu0 0
    %1016 = vmatprep.subr.bf16.mxu0 0
    %1017 = vmatpush1.bf16.msra.mxu0 0
    %1018 = vmatprep.subr.bf16.mxu0 0
    %1019 = vmatpush1.bf16.msra.mxu0 0
    %1020 = vmatprep.subr.bf16.mxu0 0
    %1021 = vmatpush1.bf16.msra.mxu0 0
    %1022 = vmatprep.subr.bf16.mxu0 0
    %1023 = vmatpush1.bf16.msra.mxu0 0
    %1024 = vmatprep.subr.bf16.mxu0 0
    %1025 = vmatpush1.bf16.msra.mxu0 0
    %1026 = vmatprep.subr.bf16.mxu0 0
    %1027 = vmatpush1.bf16.msra.mxu0 0
    %1028 = vmatprep.mubr.bf16.mxu0 0
    %1029 = vmatmul.mubr.bf16.gmra.mrb[0].mxu0 %v132
    %v1030 = vpop.f32.mrb[0].mxu0
    %v1031 = vadd.f32 %v991, %v1030
    %v1032 = vpop.f32.mrb[0].mxu0
    %v1033 = vpop.f32.mrb[0].mxu0
    %v1034 = vadd.f32 %v991, %v1033
    %v1035 = vpop.f32.mrb[0].mxu0
    %1036 = vmatprep.mubr.bf16.mxu0 0
    %1037 = vmatmul.mubr.bf16.gmra.mrb[0].mxu0 %v135
    %v1038 = vpop.f32.mrb[0].mxu0
    %v1039 = vadd.f32 %v991, %v1038
    %v1040 = vpop.f32.mrb[0].mxu0
    %v1041 = vpop.f32.mrb[0].mxu0
    %v1042 = vadd.f32 %v991, %v1041
    %v1043 = vpop.f32.mrb[0].mxu0
    %1044 = vdwg.mxu0
    %v1045 = vpack.c.bf16 %v982, %v981
    %1046 = vmatprep.subr.bf16.mxu0 0
    %1047 = vmatpush1.bf16.msra.mxu0 %v1045
    %1048 = vmatprep.subr.bf16.mxu0 0
    %1049 = vmatpush1.bf16.msra.mxu0 0
    %1050 = vmatprep.subr.bf16.mxu0 0
    %1051 = vmatpush1.bf16.msra.mxu0 0
    %1052 = vmatprep.subr.bf16.mxu0 0
    %1053 = vmatpush1.bf16.msra.mxu0 0
    %1054 = vmatprep.subr.bf16.mxu0 0
    %1055 = vmatpush1.bf16.msra.mxu0 0
    %1056 = vmatprep.subr.bf16.mxu0 0
    %1057 = vmatpush1.bf16.msra.mxu0 0
    %1058 = vmatprep.subr.bf16.mxu0 0
    %1059 = vmatpush1.bf16.msra.mxu0 0
    %1060 = vmatprep.subr.bf16.mxu0 0
    %1061 = vmatpush1.bf16.msra.mxu0 0
    %1062 = vmatprep.subr.bf16.mxu0 0
    %1063 = vmatpush1.bf16.msra.mxu0 0
    %1064 = vmatprep.subr.bf16.mxu0 0
    %1065 = vmatpush1.bf16.msra.mxu0 0
    %1066 = vmatprep.subr.bf16.mxu0 0
    %1067 = vmatpush1.bf16.msra.mxu0 0
    %1068 = vmatprep.subr.bf16.mxu0 0
    %1069 = vmatpush1.bf16.msra.mxu0 0
    %1070 = vmatprep.subr.bf16.mxu0 0
    %1071 = vmatpush1.bf16.msra.mxu0 0
    %1072 = vmatprep.subr.bf16.mxu0 0
    %1073 = vmatpush1.bf16.msra.mxu0 0
    %1074 = vmatprep.subr.bf16.mxu0 0
    %1075 = vmatpush1.bf16.msra.mxu0 0
    %1076 = vmatprep.subr.bf16.mxu0 0
    %1077 = vmatpush1.bf16.msra.mxu0 0
    %1078 = vmatprep.mubr.bf16.mxu0 0
    %1079 = vmatmul.mubr.bf16.gmra.mrb[0].mxu0 %v192
    %v1080 = vpop.f32.mrb[0].mxu0
    %v1081 = vadd.f32 %v1031, %v1080
    %v1082 = vpop.f32.mrb[0].mxu0
    %v1083 = vpop.f32.mrb[0].mxu0
    %v1084 = vadd.f32 %v1034, %v1083
    %v1085 = vpop.f32.mrb[0].mxu0
    %1086 = vmatprep.mubr.bf16.mxu0 0
    %1087 = vmatmul.mubr.bf16.gmra.mrb[0].mxu0 %v195
    %v1088 = vpop.f32.mrb[0].mxu0
    %v1089 = vadd.f32 %v1039, %v1088
    %v1090 = vpop.f32.mrb[0].mxu0
    %v1091 = vpop.f32.mrb[0].mxu0
    %v1092 = vadd.f32 %v1042, %v1091
    %v1093 = vpop.f32.mrb[0].mxu0
    %1094 = vdwg.mxu0
    %v1095 = vmax.f32 %v1081, 0.0
    %v1096 = vmax.f32 %v1084, 0.0
    %v1097 = vmax.f32 %v1089, 0.0
    %v1098 = vmax.f32 %v1092, 0.0
    %v1099 = vpack.c.bf16 %v1096, %v1095
    %v1100 = vpack.c.bf16 %v1098, %v1097
    %1101 = vmatprep.subr.bf16.mxu0 0
    %1102 = vmatpush1.bf16.msra.mxu0 %v1099
    %1103 = vmatprep.subr.bf16.mxu0 0
    %1104 = vmatpush1.bf16.msra.mxu0 %v1100
    %1105 = vmatprep.subr.bf16.mxu0 0
    %1106 = vmatpush1.bf16.msra.mxu0 0
    %1107 = vmatprep.subr.bf16.mxu0 0
    %1108 = vmatpush1.bf16.msra.mxu0 0
    %1109 = vmatprep.subr.bf16.mxu0 0
    %1110 = vmatpush1.bf16.msra.mxu0 0
    %1111 = vmatprep.subr.bf16.mxu0 0
    %1112 = vmatpush1.bf16.msra.mxu0 0
    %1113 = vmatprep.subr.bf16.mxu0 0
    %1114 = vmatpush1.bf16.msra.mxu0 0
    %1115 = vmatprep.subr.bf16.mxu0 0
    %1116 = vmatpush1.bf16.msra.mxu0 0
    %1117 = vmatprep.subr.bf16.mxu0 0
    %1118 = vmatpush1.bf16.msra.mxu0 0
    %1119 = vmatprep.subr.bf16.mxu0 0
    %1120 = vmatpush1.bf16.msra.mxu0 0
    %1121 = vmatprep.subr.bf16.mxu0 0
    %1122 = vmatpush1.bf16.msra.mxu0 0
    %1123 = vmatprep.subr.bf16.mxu0 0
    %1124 = vmatpush1.bf16.msra.mxu0 0
    %1125 = vmatprep.subr.bf16.mxu0 0
    %1126 = vmatpush1.bf16.msra.mxu0 0
    %1127 = vmatprep.subr.bf16.mxu0 0
    %1128 = vmatpush1.bf16.msra.mxu0 0
    %1129 = vmatprep.subr.bf16.mxu0 0
    %1130 = vmatpush1.bf16.msra.mxu0 0
    %1131 = vmatprep.subr.bf16.mxu0 0
    %1132 = vmatpush1.bf16.msra.mxu0 0
    %1133 = vmatprep.mubr.bf16.mxu0 0
    %1134 = vmatmul.mubr.bf16.gmra.mrb[0].mxu0 %v254
    %v1135 = vpop.f32.mrb[0].mxu0
    %v1136 = vadd.f32 0.0, %v1135
    %v1137 = vpop.f32.mrb[0].mxu0
    %v1138 = vpop.f32.mrb[0].mxu0
    %v1139 = vadd.f32 0.0, %v1138
    %v1140 = vpop.f32.mrb[0].mxu0
    %1141 = vdwg.mxu0
    %v1142 = vadd.f32 %v981, %v1136
    %v1143 = vadd.f32 %v982, %v1139
    %v1144 = vpack.c.bf16 %v1143, %v1142
    %s1145 = scalar_lea.vmem %s7, 48
    %v1146 = vld [vmem:[%s1145] sm:$0xf]
    %v1147 = vld [vmem:[%s1145 + $0x4] sm:$0xf]
    %v1148 = vld [vmem:[%s1145 + $0x8] sm:$0xf]
    %v1149 = vld [vmem:[%s1145 + $0xc] sm:$0xf]
    %s1150 = scalar_lea.vmem %s8, 3
    %v1151 = vld [vmem:[%s1150] sm:$0x1]
    %v1153 = vlaneseq
    %v1154 = vshrl.u32 %v1153, 7
    %v1155 = vsub.s32 0, %v1154
    %v1156 = vrot.slane %v1151, %v1155
    %v1162 = vunpack.c.l.b16 %v1146
    %v1163 = vunpack.c.l.b16 %v1147
    %v1164 = vunpack.c.l.b16 %v1148
    %v1165 = vunpack.c.l.b16 %v1149
    %v1166 = vpack.c.b16 %v1163, %v1162
    %v1167 = vpack.c.b16 %v1165, %v1164
    %v1171 = vsel %vm252, %v1144, 0
    %1173 = vmatprep.subr.bf16.mxu0 0
    %1174 = vmatpush1.bf16.msra.mxu0 %v1166
    %1175 = vmatprep.subr.bf16.mxu0 0
    %1176 = vmatpush1.bf16.msra.mxu0 %v1167
    %1177 = vmatprep.subr.bf16.mxu0 0
    %1178 = vmatpush1.bf16.msra.mxu0 0
    %1179 = vmatprep.subr.bf16.mxu0 0
    %1180 = vmatpush1.bf16.msra.mxu0 0
    %1181 = vmatprep.subr.bf16.mxu0 0
    %1182 = vmatpush1.bf16.msra.mxu0 0
    %1183 = vmatprep.subr.bf16.mxu0 0
    %1184 = vmatpush1.bf16.msra.mxu0 0
    %1185 = vmatprep.subr.bf16.mxu0 0
    %1186 = vmatpush1.bf16.msra.mxu0 0
    %1187 = vmatprep.subr.bf16.mxu0 0
    %1188 = vmatpush1.bf16.msra.mxu0 0
    %1189 = vmatprep.subr.bf16.mxu0 0
    %1190 = vmatpush1.bf16.msra.mxu0 0
    %1191 = vmatprep.subr.bf16.mxu0 0
    %1192 = vmatpush1.bf16.msra.mxu0 0
    %1193 = vmatprep.subr.bf16.mxu0 0
    %1194 = vmatpush1.bf16.msra.mxu0 0
    %1195 = vmatprep.subr.bf16.mxu0 0
    %1196 = vmatpush1.bf16.msra.mxu0 0
    %1197 = vmatprep.subr.bf16.mxu0 0
    %1198 = vmatpush1.bf16.msra.mxu0 0
    %1199 = vmatprep.subr.bf16.mxu0 0
    %1200 = vmatpush1.bf16.msra.mxu0 0
    %1201 = vmatprep.subr.bf16.mxu0 0
    %1202 = vmatpush1.bf16.msra.mxu0 0
    %1203 = vmatprep.subr.bf16.mxu0 0
    %1204 = vmatpush1.bf16.msra.mxu0 0
    %1205 = vmatprep.mubr.bf16.mxu0 0
    %1206 = vmatmul.mubr.bf16.gmra.mrb[0].mxu0 %v1171
    %v1207 = vpop.f32.mrb[0].mxu0
    %v1208 = vadd.f32 %v1156, %v1207
    %v1209 = vpop.f32.mrb[0].mxu0
    %v1210 = vpop.f32.mrb[0].mxu0
    %v1211 = vadd.f32 %v1156, %v1210
    %v1212 = vpop.f32.mrb[0].mxu0
    %1213 = vdwg.mxu0
    %v1214 = vsel %vm252, %v1208, 0.0
    %v1215 = vsel %vm252, %v1211, 0.0
    %v1216 = vadd.f32 %v1214, %v1215
    %v1217 = vrot.slane %v1216, 4
    %v1218 = vadd.f32 %v1216, %v1217
    %v1219 = vrot.slane %v1218, 2
    %v1220 = vadd.f32 %v1218, %v1219
    %v1221 = vrot.slane %v1220, 1
    %v1222 = vadd.f32 %v1220, %v1221
    %v1223 = vmul.f32 %v1222, 0.0625
    %v1224 = vmul.f32 %v1208, %v1208
    %v1225 = vmul.f32 %v1211, %v1211
    %v1226 = vsel %vm252, %v1224, 0.0
    %v1227 = vsel %vm252, %v1225, 0.0
    %v1228 = vadd.f32 %v1226, %v1227
    %v1229 = vrot.slane %v1228, 4
    %v1230 = vadd.f32 %v1228, %v1229
    %v1231 = vrot.slane %v1230, 2
    %v1232 = vadd.f32 %v1230, %v1231
    %v1233 = vrot.slane %v1232, 1
    %v1234 = vadd.f32 %v1232, %v1233
    %v1235 = vmul.f32 %v1234, 0.0625
    %v1236 = vmul.f32 %v1223, %v1223
    %v1237 = vsub.f32 %v1235, %v1236
    %v1238 = vsub.f32 %v1208, %v1223
    %v1239 = vsub.f32 %v1211, %v1223
    %v1240 = vadd.f32 %v1237, 1e-05
    %v1241 = vrsqrt.pop %v1240
    %v1242 = vmul.f32 %v1238, %v1241
    %v1243 = vmul.f32 %v1239, %v1241
    %s1244 = scalar_lea.vmem %s9, 3
    %v1245 = vld [vmem:[%s1244] sm:$0x1]
    %v1247 = vlaneseq
    %v1248 = vshrl.u32 %v1247, 7
    %v1249 = vsub.s32 0, %v1248
    %v1250 = vrot.slane %v1245, %v1249
    %v1252 = vmul.f32 %v1242, %v1250
    %v1253 = vmul.f32 %v1243, %v1250
    %s1254 = scalar_lea.vmem %s10, 3
    %v1255 = vld [vmem:[%s1254] sm:$0x1]
    %v1257 = vlaneseq
    %v1258 = vshrl.u32 %v1257, 7
    %v1259 = vsub.s32 0, %v1258
    %v1260 = vrot.slane %v1255, %v1259
    %v1262 = vadd.f32 %v1252, %v1260
    %v1263 = vadd.f32 %v1253, %v1260
    %v1264 = vmax.f32 %v1262, 0.0
    %v1265 = vmax.f32 %v1263, 0.0
    %v1266 = vpack.c.bf16 %v1265, %v1264
    %v1268 = vsel %vm106, %v113, 0
    %1270 = vmatprep.subr.bf16.mxu0 0
    %1271 = vmatpush1.bf16.msra.mxu0 %v1266
    %1272 = vmatprep.subr.bf16.mxu0 0
    %1273 = vmatpush1.bf16.msra.mxu0 0
    %1274 = vmatprep.subr.bf16.mxu0 0
    %1275 = vmatpush1.bf16.msra.mxu0 0
    %1276 = vmatprep.subr.bf16.mxu0 0
    %1277 = vmatpush1.bf16.msra.mxu0 0
    %1278 = vmatprep.subr.bf16.mxu0 0
    %1279 = vmatpush1.bf16.msra.mxu0 0
    %1280 = vmatprep.subr.bf16.mxu0 0
    %1281 = vmatpush1.bf16.msra.mxu0 0
    %1282 = vmatprep.subr.bf16.mxu0 0
    %1283 = vmatpush1.bf16.msra.mxu0 0
    %1284 = vmatprep.subr.bf16.mxu0 0
    %1285 = vmatpush1.bf16.msra.mxu0 0
    %1286 = vmatprep.subr.bf16.mxu0 0
    %1287 = vmatpush1.bf16.msra.mxu0 0
    %1288 = vmatprep.subr.bf16.mxu0 0
    %1289 = vmatpush1.bf16.msra.mxu0 0
    %1290 = vmatprep.subr.bf16.mxu0 0
    %1291 = vmatpush1.bf16.msra.mxu0 0
    %1292 = vmatprep.subr.bf16.mxu0 0
    %1293 = vmatpush1.bf16.msra.mxu0 0
    %1294 = vmatprep.subr.bf16.mxu0 0
    %1295 = vmatpush1.bf16.msra.mxu0 0
    %1296 = vmatprep.subr.bf16.mxu0 0
    %1297 = vmatpush1.bf16.msra.mxu0 0
    %1298 = vmatprep.subr.bf16.mxu0 0
    %1299 = vmatpush1.bf16.msra.mxu0 0
    %1300 = vmatprep.subr.bf16.mxu0 0
    %1301 = vmatpush1.bf16.msra.mxu0 0
    %1302 = vmatprep.mubr.bf16.mxu0 0
    %1303 = vmatmul.mubr.bf16.gmra.mrb[0].mxu0 %v1268
    %v1304 = vpop.f32.mrb[0].mxu0
    %v1305 = vadd.f32 0.0, %v1304
    %v1306 = vpop.f32.mrb[0].mxu0
    %v1307 = vpop.f32.mrb[0].mxu0
    %v1308 = vpop.f32.mrb[0].mxu0
    %1309 = vdwg.mxu0
    %v1310 = vmul.f32 %v1305, %v112
    %v1311 = vpack.c.bf16 %v1310, %v1310
    %v1312 = vld [vmem:[%s11] sm:$0xf]
    %v1313 = vld [vmem:[%s11 + $0x4] sm:$0xf]
    %v1314 = vld [vmem:[%s11 + $0x8] sm:$0xf]
    %v1315 = vld [vmem:[%s11 + $0xc] sm:$0xf]
    %v1316 = vld [vmem:[%s12] sm:$0x1]
    %v1318 = vlaneseq
    %v1319 = vshrl.u32 %v1318, 7
    %v1320 = vsub.s32 0, %v1319
    %v1321 = vrot.slane %v1316, %v1320
    %v1327 = vunpack.c.l.b16 %v1312
    %v1328 = vunpack.c.l.b16 %v1313
    %v1329 = vunpack.c.l.b16 %v1314
    %v1330 = vunpack.c.l.b16 %v1315
    %v1331 = vpack.c.b16 %v1328, %v1327
    %v1332 = vpack.c.b16 %v1330, %v1329
    %v1336 = vsel %vm252, %v1311, 0
    %1338 = vmatprep.subr.bf16.mxu0 0
    %1339 = vmatpush1.bf16.msra.mxu0 %v1331
    %1340 = vmatprep.subr.bf16.mxu0 0
    %1341 = vmatpush1.bf16.msra.mxu0 %v1332
    %1342 = vmatprep.subr.bf16.mxu0 0
    %1343 = vmatpush1.bf16.msra.mxu0 0
    %1344 = vmatprep.subr.bf16.mxu0 0
    %1345 = vmatpush1.bf16.msra.mxu0 0
    %1346 = vmatprep.subr.bf16.mxu0 0
    %1347 = vmatpush1.bf16.msra.mxu0 0
    %1348 = vmatprep.subr.bf16.mxu0 0
    %1349 = vmatpush1.bf16.msra.mxu0 0
    %1350 = vmatprep.subr.bf16.mxu0 0
    %1351 = vmatpush1.bf16.msra.mxu0 0
    %1352 = vmatprep.subr.bf16.mxu0 0
    %1353 = vmatpush1.bf16.msra.mxu0 0
    %1354 = vmatprep.subr.bf16.mxu0 0
    %1355 = vmatpush1.bf16.msra.mxu0 0
    %1356 = vmatprep.subr.bf16.mxu0 0
    %1357 = vmatpush1.bf16.msra.mxu0 0
    %1358 = vmatprep.subr.bf16.mxu0 0
    %1359 = vmatpush1.bf16.msra.mxu0 0
    %1360 = vmatprep.subr.bf16.mxu0 0
    %1361 = vmatpush1.bf16.msra.mxu0 0
    %1362 = vmatprep.subr.bf16.mxu0 0
    %1363 = vmatpush1.bf16.msra.mxu0 0
    %1364 = vmatprep.subr.bf16.mxu0 0
    %1365 = vmatpush1.bf16.msra.mxu0 0
    %1366 = vmatprep.subr.bf16.mxu0 0
    %1367 = vmatpush1.bf16.msra.mxu0 0
    %1368 = vmatprep.subr.bf16.mxu0 0
    %1369 = vmatpush1.bf16.msra.mxu0 0
    %1370 = vmatprep.mubr.bf16.mxu0 0
    %1371 = vmatmul.mubr.bf16.gmra.mrb[0].mxu0 %v1336
    %v1372 = vpop.f32.mrb[0].mxu0
    %v1373 = vadd.f32 %v1321, %v1372
    %v1374 = vpop.f32.mrb[0].mxu0
    %v1375 = vpop.f32.mrb[0].mxu0
    %v1376 = vpop.f32.mrb[0].mxu0
    %1377 = vdwg.mxu0
    %v1378 = vmax.f32 %v1373, 0.0
    %v1379 = vpack.c.bf16 %v1378, %v1378
    %v1380 = vld [vmem:[%s13] sm:$0xf]
    %v1381 = vld [vmem:[%s13 + $0x4] sm:$0xf]
    %v1382 = vld [vmem:[%s13 + $0x8] sm:$0xf]
    %v1383 = vld [vmem:[%s13 + $0xc] sm:$0xf]
    %v1384 = vld [vmem:[%s14] sm:$0x1]
    %v1386 = vlaneseq
    %v1387 = vshrl.u32 %v1386, 7
    %v1388 = vsub.s32 0, %v1387
    %v1389 = vrot.slane %v1384, %v1388
    %v1395 = vunpack.c.l.b16 %v1380
    %v1396 = vunpack.c.l.b16 %v1381
    %v1397 = vunpack.c.l.b16 %v1382
    %v1398 = vunpack.c.l.b16 %v1383
    %v1399 = vpack.c.b16 %v1396, %v1395
    %v1400 = vpack.c.b16 %v1398, %v1397
    %v1404 = vsel %vm252, %v1379, 0
    %1406 = vmatprep.subr.bf16.mxu0 0
    %1407 = vmatpush1.bf16.msra.mxu0 %v1399
    %1408 = vmatprep.subr.bf16.mxu0 0
    %1409 = vmatpush1.bf16.msra.mxu0 %v1400
    %1410 = vmatprep.subr.bf16.mxu0 0
    %1411 = vmatpush1.bf16.msra.mxu0 0
    %1412 = vmatprep.subr.bf16.mxu0 0
    %1413 = vmatpush1.bf16.msra.mxu0 0
    %1414 = vmatprep.subr.bf16.mxu0 0
    %1415 = vmatpush1.bf16.msra.mxu0 0
    %1416 = vmatprep.subr.bf16.mxu0 0
    %1417 = vmatpush1.bf16.msra.mxu0 0
    %1418 = vmatprep.subr.bf16.mxu0 0
    %1419 = vmatpush1.bf16.msra.mxu0 0
    %1420 = vmatprep.subr.bf16.mxu0 0
    %1421 = vmatpush1.bf16.msra.mxu0 0
    %1422 = vmatprep.subr.bf16.mxu0 0
    %1423 = vmatpush1.bf16.msra.mxu0 0
    %1424 = vmatprep.subr.bf16.mxu0 0
    %1425 = vmatpush1.bf16.msra.mxu0 0
    %1426 = vmatprep.subr.bf16.mxu0 0
    %1427 = vmatpush1.bf16.msra.mxu0 0
    %1428 = vmatprep.subr.bf16.mxu0 0
    %1429 = vmatpush1.bf16.msra.mxu0 0
    %1430 = vmatprep.subr.bf16.mxu0 0
    %1431 = vmatpush1.bf16.msra.mxu0 0
    %1432 = vmatprep.subr.bf16.mxu0 0
    %1433 = vmatpush1.bf16.msra.mxu0 0
    %1434 = vmatprep.subr.bf16.mxu0 0
    %1435 = vmatpush1.bf16.msra.mxu0 0
    %1436 = vmatprep.subr.bf16.mxu0 0
    %1437 = vmatpush1.bf16.msra.mxu0 0
    %1438 = vmatprep.mubr.bf16.mxu0 0
    %1439 = vmatmul.mubr.bf16.gmra.mrb[0].mxu0 %v1404
    %v1440 = vpop.f32.mrb[0].mxu0
    %v1441 = vadd.f32 %v1389, %v1440
    %v1442 = vpop.f32.mrb[0].mxu0
    %v1443 = vpop.f32.mrb[0].mxu0
    %v1444 = vpop.f32.mrb[0].mxu0
    %1445 = vdwg.mxu0
    %v1446 = vmax.f32 %v1441, 0.0
    %v1447 = vpack.c.bf16 %v1446, %v1446
    %v1448 = vld [vmem:[%s15] sm:$0xf]
    %v1449 = vld [vmem:[%s15 + $0x4] sm:$0xf]
    %v1450 = vld [vmem:[%s16] sm:$0x1]
    %v1452 = vlaneseq
    %v1453 = vshrl.u32 %v1452, 7
    %v1454 = vsub.s32 0, %v1453
    %v1455 = vrot.slane %v1450, %v1454
    %v1459 = vunpack.c.l.b16 %v1448
    %v1460 = vunpack.c.l.b16 %v1449
    %v1461 = vpack.c.b16 %v1460, %v1459
    %v1464 = vsel %vm106, %v1447, 0
    %1466 = vmatprep.subr.bf16.mxu0 0
    %1467 = vmatpush1.bf16.msra.mxu0 %v1461
    %1468 = vmatprep.subr.bf16.mxu0 0
    %1469 = vmatpush1.bf16.msra.mxu0 0
    %1470 = vmatprep.subr.bf16.mxu0 0
    %1471 = vmatpush1.bf16.msra.mxu0 0
    %1472 = vmatprep.subr.bf16.mxu0 0
    %1473 = vmatpush1.bf16.msra.mxu0 0
    %1474 = vmatprep.subr.bf16.mxu0 0
    %1475 = vmatpush1.bf16.msra.mxu0 0
    %1476 = vmatprep.subr.bf16.mxu0 0
    %1477 = vmatpush1.bf16.msra.mxu0 0
    %1478 = vmatprep.subr.bf16.mxu0 0
    %1479 = vmatpush1.bf16.msra.mxu0 0
    %1480 = vmatprep.subr.bf16.mxu0 0
    %1481 = vmatpush1.bf16.msra.mxu0 0
    %1482 = vmatprep.subr.bf16.mxu0 0
    %1483 = vmatpush1.bf16.msra.mxu0 0
    %1484 = vmatprep.subr.bf16.mxu0 0
    %1485 = vmatpush1.bf16.msra.mxu0 0
    %1486 = vmatprep.subr.bf16.mxu0 0
    %1487 = vmatpush1.bf16.msra.mxu0 0
    %1488 = vmatprep.subr.bf16.mxu0 0
    %1489 = vmatpush1.bf16.msra.mxu0 0
    %1490 = vmatprep.subr.bf16.mxu0 0
    %1491 = vmatpush1.bf16.msra.mxu0 0
    %1492 = vmatprep.subr.bf16.mxu0 0
    %1493 = vmatpush1.bf16.msra.mxu0 0
    %1494 = vmatprep.subr.bf16.mxu0 0
    %1495 = vmatpush1.bf16.msra.mxu0 0
    %1496 = vmatprep.subr.bf16.mxu0 0
    %1497 = vmatpush1.bf16.msra.mxu0 0
    %1498 = vmatprep.mubr.bf16.mxu0 0
    %1499 = vmatmul.mubr.bf16.gmra.mrb[0].mxu0 %v1464
    %v1500 = vpop.f32.mrb[0].mxu0
    %v1501 = vadd.f32 %v1455, %v1500
    %v1502 = vpop.f32.mrb[0].mxu0
    %v1503 = vpop.f32.mrb[0].mxu0
    %v1504 = vpop.f32.mrb[0].mxu0
    %1505 = vdwg.mxu0
    %1506 = vst [vmem:[#allocation2] sm:$0xff] %v1501
    // Predicated region
    $region70: #{tpu_custom_call.1} parent=1 // pred_check
      _
    $region71: #{tpu_custom_call.1} parent=1 // pred_check_branch
      %1508 = sbr.rel (0) target = $region73
    $region72: #{tpu_custom_call.1} parent=1 // pred_region
      %s1510 = ssub.s32 128, 128
      %1511 = vsyncadd [#allocation3], %s1510
      %s1513 = sshll.u32 [#allocation2], 4
      %s1514 = int_to_ptr.vmem [resolvable:$true] %s1513
      %1516 = dma.vmem_to_hbm [thread:$0]  %s1514, 128, %s17, [#allocation3]
    $region73: #{tpu_custom_call.1} parent=1 // pred_fallthru
      _
    // Predicated region
    $region74: #{tpu_custom_call.1} parent=1 // pred_check
      _
    $region75: #{tpu_custom_call.1} parent=1 // pred_check_branch
      %1518 = sbr.rel (0) target = $region77
    $region76: #{tpu_custom_call.1} parent=1 // pred_region
      %1519 = dma.done [#allocation3], 128
    $region77: #{tpu_custom_call.1} parent=1 // pred_fallthru
      _
    %1520 = vsyncpa [#allocation3], 1

</llo_original>
